<compile_context>
chip_gen: v7x
topology: tpu7x:2x2x1
jax: 0.10.0
libtpu: 0.0.40
codegen_flags: <defaults>
</compile_context>

<pallas_src>
import math

import jax
import jax.numpy as jnp
from jax import lax
from jax.experimental import pallas as pl
from jax.experimental.pallas import tpu as pltpu

# ----------------------- small demo configuration -----------------------
D_MODEL = 32       # num_hid_1  (LSTM hidden size / d_model)
NUM_HID_2 = 32     # num_hid_2
SIZE_ACTION = 6    # size_action == n_actions
SEQ_LEN = 8
BATCH = 2
B_PAD = 8          # pad batch to the f32 sublane tile
OUT_PAD = 128      # lane-dense output width (>= 2 * SIZE_ACTION)


# ----------------------------- glue (JAX) -------------------------------
def positional_encoding(max_len: int, d_model: int) -> jnp.ndarray:
    position = jnp.arange(max_len, dtype=jnp.float32)[:, None]
    div_term = jnp.exp(
        jnp.arange(0, d_model, 2, dtype=jnp.float32) * (-math.log(10000.0) / d_model)
    )
    pe = jnp.zeros((max_len, d_model), dtype=jnp.float32)
    pe = pe.at[:, 0::2].set(jnp.sin(position * div_term))
    pe = pe.at[:, 1::2].set(jnp.cos(position * div_term))
    return pe


def init_params(key):
    d, h2, a = D_MODEL, NUM_HID_2, SIZE_ACTION
    ks = jax.random.split(key, 12)
    s = 0.1
    emb = s * jax.random.normal(ks[0], (a + 1, d), jnp.float32)
    emb = emb.at[0].set(0.0)  # padding_idx = 0
    return dict(
        emb=emb,
        # LSTM layer 0 (input size = d_model), PyTorch gate order [i, f, g, o]
        wih0=s * jax.random.normal(ks[1], (d, 4 * d), jnp.float32),
        whh0=s * jax.random.normal(ks[2], (d, 4 * d), jnp.float32),
        b0=(s * jax.random.normal(ks[3], (1, 4 * d), jnp.float32)
            + s * jax.random.normal(ks[4], (1, 4 * d), jnp.float32)),  # b_ih + b_hh
        # LSTM layer 1 (input size = d_model)
        wih1=s * jax.random.normal(ks[5], (d, 4 * d), jnp.float32),
        whh1=s * jax.random.normal(ks[6], (d, 4 * d), jnp.float32),
        b1=(s * jax.random.normal(ks[7], (1, 4 * d), jnp.float32)
            + s * jax.random.normal(ks[8], (1, 4 * d), jnp.float32)),
        # MLP
        w1=s * jax.random.normal(ks[9], (d, h2), jnp.float32),
        bm1=s * jax.random.normal(ks[10], (1, h2), jnp.float32),
        w2=s * jax.random.normal(ks[11], (h2, 2 * a), jnp.float32),
        bm2=jnp.zeros((1, 2 * a), jnp.float32),
    )


def _reorder_gates(w):
    """Reorder gate column-blocks from PyTorch [i, f, g, o] to [i, f, o, g]."""
    h = w.shape[-1] // 4
    return jnp.concatenate([w[..., : 2 * h], w[..., 3 * h:], w[..., 2 * h: 3 * h]],
                           axis=-1)


def _scale_ifo(w):
    """Fold the 0.5 of sigmoid(x) = 0.5*tanh(0.5*x) + 0.5 into i/f/o columns."""
    h = w.shape[-1] // 4
    return jnp.concatenate([0.5 * w[..., : 3 * h], w[..., 3 * h:]], axis=-1)


# ------------------------------ kernel ----------------------------------
def tb_kernel(gih0_ref,                    # (T, B_PAD, 4H) precomputed l0 input gates (+b0, ifo pre-scaled)
              wmask_ref,                   # (T, B_PAD, H)  per-step accumulation weight
              wf_ref,                      # (2H, 8H)  fused [[wih1, whh0],[whh1, 0]]
              b1b_ref,                     # (B_PAD, 4H) layer-1 bias, pre-broadcast
              w1_ref, bm1_ref,             # (H, H2), (1, H2)
              w2_ref, bm2_ref,             # (H2, OUT_PAD), (1, OUT_PAD)  lane-dense head
              out_ref):                    # (B_PAD, OUT_PAD)
    T, B, G4 = gih0_ref.shape
    H = G4 // 4

    def cell_act(gates, c):
        # Gates ordered [i, f, o, g]; i/f/o pre-activations were pre-scaled by 0.5,
        # so one tanh over 4H lanes gives all four gates (sigmoid = 0.5*t + 0.5).
        tg = jnp.tanh(gates)
        sg = 0.5 * tg[:, : 3 * H] + 0.5
        c_new = sg[:, H: 2 * H] * c + sg[:, :H] * tg[:, 3 * H:]
        h_new = sg[:, 2 * H: 3 * H] * jnp.tanh(c_new)
        return h_new, c_new

    def body(t, carry):
        h0, c0, h1, c1, r0, acc = carry
        # Layer 0: input-side gates precomputed; recurrent term r0 carried from
        # the previous step's fused matmul (r0_0 = 0 since h0_0 = 0).
        h0, c0 = cell_act(gih0_ref[t] + r0, c0)
        # Single MXU push per step: [h0_new | h1_old] @ Wf -> [g1_t | r0_{t+1}]
        fused = jnp.dot(jnp.concatenate([h0, h1], axis=-1), wf_ref[...],
                        preferred_element_type=jnp.float32)          # (B, 8H)
        g1 = fused[:, :G4] + b1b_ref[...]
        r0_next = fused[:, G4:]
        h1, c1 = cell_act(g1, c1)
        # Masked, pre-normalized accumulation (weights hoisted to the wrapper).
        acc = acc + wmask_ref[t] * h1
        return h0, c0, h1, c1, r0_next, acc

    z_bh = jnp.zeros((B, H), jnp.float32)
    z_bg = jnp.zeros((B, G4), jnp.float32)
    init = (z_bh, z_bh, z_bh, z_bh, z_bg, z_bh)
    # Static trip count, full unroll (T = 9).  Use partial unroll if T grows.
    carry = lax.fori_loop(0, T, body, init, unroll=True)
    mean = carry[-1]                                   # already mean over valid steps

    hid = jnp.dot(mean, w1_ref[...], preferred_element_type=jnp.float32) + bm1_ref[...]
    hid = jnp.where(hid > 0, hid, 0.01 * hid)          # LeakyReLU(0.01)
    out_ref[...] = (jnp.dot(hid, w2_ref[...], preferred_element_type=jnp.float32)
                    + bm2_ref[...])


# ----------------------------- wrapper -----------------------------------
def tb_model_forward(params, x):
    """x: (B, SEQ_LEN) int32 tokens in [0, SIZE_ACTION]; 0 is padding."""
    B, seqlen = x.shape
    T = seqlen + 1
    H = D_MODEL
    beg = jnp.full((B, 1), SIZE_ACTION, dtype=jnp.int32)
    obs = jnp.concatenate([beg, x.astype(jnp.int32)], axis=1)            # (B, T)
    real_len = jnp.maximum(
        jnp.max(jnp.sum(obs != 0, axis=1)), 1).astype(jnp.int32)         # scalar >= 1

    # Reorder all gate tensors to [i, f, o, g] and fold 0.5 into i/f/o columns.
    wih0 = _scale_ifo(_reorder_gates(params["wih0"]))
    whh0 = _scale_ifo(_reorder_gates(params["whh0"]))
    b0 = _scale_ifo(_reorder_gates(params["b0"]))
    wih1 = _scale_ifo(_reorder_gates(params["wih1"]))
    whh1 = _scale_ifo(_reorder_gates(params["whh1"]))
    b1 = _scale_ifo(_reorder_gates(params["b1"]))

    # Precompute layer-0 input-side gates: (emb[obs] + pe) @ wih0 + b0
    pe = positional_encoding(T, H)                                       # (T, H)
    emb_proj = params["emb"] @ wih0                                      # (A+1, 4H)
    pe_proj = pe @ wih0                                                  # (T, 4H)
    gih0 = jnp.take(emb_proj, obs, axis=0) + pe_proj[None] + b0          # (B, T, 4H)
    gih0 = jnp.transpose(gih0, (1, 0, 2))                                # (T, B, 4H)
    gih0 = jnp.pad(gih0, ((0, 0), (0, B_PAD - B), (0, 0)))               # (T, 8, 4H)

    # Fused recurrence weight: [h0_new | h1_old] @ Wf = [g1_t | r0_{t+1}]
    Wf = jnp.concatenate(
        [jnp.concatenate([wih1, whh0], axis=1),                          # rows for h0_new
         jnp.concatenate([whh1, jnp.zeros_like(whh0)], axis=1)],         # rows for h1_old
        axis=0)                                                          # (2H, 8H) = (64, 256)

    b1b = jnp.broadcast_to(b1, (B_PAD, 4 * H))                           # (8, 4H)

    # Per-step accumulation weights: (t < real_len) / real_len, hoisted out of kernel.
    inv_len = 1.0 / real_len.astype(jnp.float32)
    wvec = jnp.where(jnp.arange(T) < real_len, inv_len, 0.0).astype(jnp.float32)
    wmask = jnp.broadcast_to(wvec[:, None, None], (T, B_PAD, H))         # (T, 8, H)

    # Lane-dense output head: pad w2/bm2 to 128 columns.
    w2p = jnp.zeros((NUM_HID_2, OUT_PAD), jnp.float32)
    w2p = w2p.at[:, : 2 * SIZE_ACTION].set(params["w2"])
    bm2p = jnp.zeros((1, OUT_PAD), jnp.float32)
    bm2p = bm2p.at[:, : 2 * SIZE_ACTION].set(params["bm2"])

    out = pl.pallas_call(
        tb_kernel,
        out_shape=jax.ShapeDtypeStruct((B_PAD, OUT_PAD), jnp.float32),
        in_specs=[pl.BlockSpec(memory_space=pltpu.MemorySpace.VMEM)] * 8,
        out_specs=pl.BlockSpec(memory_space=pltpu.MemorySpace.VMEM),
    )(gih0, wmask, Wf, b1b, params["w1"], params["bm1"], w2p, bm2p)

    logits = out[:B, : 2 * SIZE_ACTION]
    P_F = logits[..., :SIZE_ACTION]
    P_B = logits[..., SIZE_ACTION:]
    return P_F, P_B


# --------------------- pure-JAX reference (for check) --------------------
def tb_model_ref(params, x):
    B, seqlen = x.shape
    beg = jnp.full((B, 1), SIZE_ACTION, dtype=jnp.int32)
    obs = jnp.concatenate([beg, x.astype(jnp.int32)], axis=1)
    T = seqlen + 1
    real_len = int(jnp.max(jnp.sum(obs != 0, axis=1)))
    pe = positional_encoding(T, D_MODEL)
    src = jnp.take(params["emb"], obs, axis=0) + pe[None]
    src = src[:, :real_len]
    H = D_MODEL

    def cell(x_t, h, c, wih, whh, b):
        gates = x_t @ wih + h @ whh + b      # PyTorch gate order [i, f, g, o]
        i = jax.nn.sigmoid(gates[:, :H]); f = jax.nn.sigmoid(gates[:, H:2 * H])
        g = jnp.tanh(gates[:, 2 * H:3 * H]); o = jax.nn.sigmoid(gates[:, 3 * H:])
        c = f * c + i * g
        return o * jnp.tanh(c), c

    h0 = c0 = h1 = c1 = jnp.zeros((B, H), jnp.float32)
    outs = []
    for t in range(real_len):
        h0, c0 = cell(src[:, t], h0, c0, params["wih0"], params["whh0"], params["b0"])
        h1, c1 = cell(h0, h1, c1, params["wih1"], params["whh1"], params["b1"])
        outs.append(h1)
    mean = jnp.stack(outs, axis=1).mean(axis=1)
    hid = mean @ params["w1"] + params["bm1"]
    hid = jnp.where(hid > 0, hid, 0.01 * hid)
    logits = hid @ params["w2"] + params["bm2"]
    return logits[..., :SIZE_ACTION], logits[..., SIZE_ACTION:]


# ------------------------------- main ------------------------------------
if __name__ == "__main__":
    key = jax.random.PRNGKey(0)
    pkey, xkey = jax.random.split(key)
    params = init_params(pkey)
    # tokens in [0, SIZE_ACTION]; 0 is padding, SIZE_ACTION is a valid action id
    x = jax.random.randint(xkey, (BATCH, SEQ_LEN), 0, SIZE_ACTION + 1, dtype=jnp.int32)

    P_F, P_B = tb_model_forward(params, x)
    jax.block_until_ready((P_F, P_B))

    rF, rB = tb_model_ref(params, x)
    assert P_F.shape == (BATCH, SIZE_ACTION) and P_B.shape == (BATCH, SIZE_ACTION)
    assert jnp.allclose(P_F, rF, atol=2e-3, rtol=2e-3), "P_F mismatch vs reference"
    assert jnp.allclose(P_B, rB, atol=2e-3, rtol=2e-3), "P_B mismatch vs reference"
    print("KERNEL_OK")
</pallas_src>

<mosaic_0001>
module attributes {stable_mosaic.version = 11 : i64} {
  func.func @tb_kernel(%arg0: memref<9x8x128xf32, #tpu.memory_space<vmem>>, %arg1: memref<9x8x32xf32, #tpu.memory_space<vmem>>, %arg2: memref<64x256xf32, #tpu.memory_space<vmem>>, %arg3: memref<8x128xf32, #tpu.memory_space<vmem>>, %arg4: memref<32x32xf32, #tpu.memory_space<vmem>>, %arg5: memref<1x32xf32, #tpu.memory_space<vmem>>, %arg6: memref<32x128xf32, #tpu.memory_space<vmem>>, %arg7: memref<1x128xf32, #tpu.memory_space<vmem>>, %arg8: memref<8x128xf32, #tpu.memory_space<vmem>>) attributes {dimension_semantics = [], scalar_prefetch = 0 : i64, scratch_operands = 0 : i64, tpu.core_type = #tpu.core_type<tc>} {
    %cst = arith.constant 0.000000e+00 : f32
    %0 = vector.broadcast %cst : f32 to vector<8x32xf32>
    %cst_0 = arith.constant 0.000000e+00 : f32
    %1 = vector.broadcast %cst_0 : f32 to vector<8x128xf32>
    %c0_i32 = arith.constant 0 : i32
    %2 = arith.index_cast %c0_i32 : i32 to index
    %c0 = arith.constant 0 : index
    %c0_1 = arith.constant 0 : index
    %3 = vector.load %arg0[%2, %c0, %c0_1] : memref<9x8x128xf32, #tpu.memory_space<vmem>>, vector<1x8x128xf32>
    %4 = vector.shape_cast %3 : vector<1x8x128xf32> to vector<8x128xf32>
    %5 = arith.addf %4, %1 : vector<8x128xf32>
    %6 = math.tanh %5 : vector<8x128xf32>
    %7 = vector.extract_strided_slice %6 {offsets = [0, 0], sizes = [8, 96], strides = [1, 1]} : vector<8x128xf32> to vector<8x96xf32>
    %cst_2 = arith.constant 5.000000e-01 : f32
    %8 = vector.broadcast %cst_2 : f32 to vector<8x96xf32>
    %9 = arith.mulf %8, %7 : vector<8x96xf32>
    %cst_3 = arith.constant 5.000000e-01 : f32
    %10 = vector.broadcast %cst_3 : f32 to vector<8x96xf32>
    %11 = arith.addf %9, %10 : vector<8x96xf32>
    %12 = vector.extract_strided_slice %11 {offsets = [0, 32], sizes = [8, 32], strides = [1, 1]} : vector<8x96xf32> to vector<8x32xf32>
    %13 = arith.mulf %12, %0 : vector<8x32xf32>
    %14 = vector.extract_strided_slice %11 {offsets = [0, 0], sizes = [8, 32], strides = [1, 1]} : vector<8x96xf32> to vector<8x32xf32>
    %15 = vector.extract_strided_slice %6 {offsets = [0, 96], sizes = [8, 32], strides = [1, 1]} : vector<8x128xf32> to vector<8x32xf32>
    %16 = arith.mulf %14, %15 : vector<8x32xf32>
    %17 = arith.addf %13, %16 : vector<8x32xf32>
    %18 = vector.extract_strided_slice %11 {offsets = [0, 64], sizes = [8, 32], strides = [1, 1]} : vector<8x96xf32> to vector<8x32xf32>
    %19 = math.tanh %17 : vector<8x32xf32>
    %20 = arith.mulf %18, %19 : vector<8x32xf32>
    %21 = tpu.concatenate %20, %0 in 1 : vector<8x32xf32>, vector<8x32xf32> -> vector<8x64xf32>
    %c0_4 = arith.constant 0 : index
    %c0_5 = arith.constant 0 : index
    %22 = vector.load %arg2[%c0_4, %c0_5] : memref<64x256xf32, #tpu.memory_space<vmem>>, vector<64x256xf32>
    %cst_6 = arith.constant dense<0.000000e+00> : vector<8x256xf32>
    %23 = tpu.matmul %21, %22, %cst_6 {dimension_numbers = #tpu.dot_dimension_numbers<[1], [0], [0], [1], [0, 0, 1, 1], [], []>} : vector<8x64xf32>, vector<64x256xf32>, vector<8x256xf32> -> vector<8x256xf32>
    %24 = vector.extract_strided_slice %23 {offsets = [0, 0], sizes = [8, 128], strides = [1, 1]} : vector<8x256xf32> to vector<8x128xf32>
    %c0_7 = arith.constant 0 : index
    %c0_8 = arith.constant 0 : index
    %25 = vector.load %arg3[%c0_7, %c0_8] : memref<8x128xf32, #tpu.memory_space<vmem>>, vector<8x128xf32>
    %26 = arith.addf %24, %25 : vector<8x128xf32>
    %27 = vector.extract_strided_slice %23 {offsets = [0, 128], sizes = [8, 128], strides = [1, 1]} : vector<8x256xf32> to vector<8x128xf32>
    %28 = math.tanh %26 : vector<8x128xf32>
    %29 = vector.extract_strided_slice %28 {offsets = [0, 0], sizes = [8, 96], strides = [1, 1]} : vector<8x128xf32> to vector<8x96xf32>
    %cst_9 = arith.constant 5.000000e-01 : f32
    %30 = vector.broadcast %cst_9 : f32 to vector<8x96xf32>
    %31 = arith.mulf %30, %29 : vector<8x96xf32>
    %cst_10 = arith.constant 5.000000e-01 : f32
    %32 = vector.broadcast %cst_10 : f32 to vector<8x96xf32>
    %33 = arith.addf %31, %32 : vector<8x96xf32>
    %34 = vector.extract_strided_slice %33 {offsets = [0, 32], sizes = [8, 32], strides = [1, 1]} : vector<8x96xf32> to vector<8x32xf32>
    %35 = arith.mulf %34, %0 : vector<8x32xf32>
    %36 = vector.extract_strided_slice %33 {offsets = [0, 0], sizes = [8, 32], strides = [1, 1]} : vector<8x96xf32> to vector<8x32xf32>
    %37 = vector.extract_strided_slice %28 {offsets = [0, 96], sizes = [8, 32], strides = [1, 1]} : vector<8x128xf32> to vector<8x32xf32>
    %38 = arith.mulf %36, %37 : vector<8x32xf32>
    %39 = arith.addf %35, %38 : vector<8x32xf32>
    %40 = vector.extract_strided_slice %33 {offsets = [0, 64], sizes = [8, 32], strides = [1, 1]} : vector<8x96xf32> to vector<8x32xf32>
    %41 = math.tanh %39 : vector<8x32xf32>
    %42 = arith.mulf %40, %41 : vector<8x32xf32>
    %43 = arith.index_cast %c0_i32 : i32 to index
    %c0_11 = arith.constant 0 : index
    %c0_12 = arith.constant 0 : index
    %44 = vector.load %arg1[%43, %c0_11, %c0_12] : memref<9x8x32xf32, #tpu.memory_space<vmem>>, vector<1x8x32xf32>
    %45 = vector.shape_cast %44 : vector<1x8x32xf32> to vector<8x32xf32>
    %46 = arith.mulf %45, %42 : vector<8x32xf32>
    %47 = arith.addf %0, %46 : vector<8x32xf32>
    %c1_i32 = arith.constant 1 : i32
    %48 = arith.index_cast %c1_i32 : i32 to index
    %c0_13 = arith.constant 0 : index
    %c0_14 = arith.constant 0 : index
    %49 = vector.load %arg0[%48, %c0_13, %c0_14] : memref<9x8x128xf32, #tpu.memory_space<vmem>>, vector<1x8x128xf32>
    %50 = vector.shape_cast %49 : vector<1x8x128xf32> to vector<8x128xf32>
    %51 = arith.addf %50, %27 : vector<8x128xf32>
    %52 = math.tanh %51 : vector<8x128xf32>
    %53 = vector.extract_strided_slice %52 {offsets = [0, 0], sizes = [8, 96], strides = [1, 1]} : vector<8x128xf32> to vector<8x96xf32>
    %cst_15 = arith.constant 5.000000e-01 : f32
    %54 = vector.broadcast %cst_15 : f32 to vector<8x96xf32>
    %55 = arith.mulf %54, %53 : vector<8x96xf32>
    %cst_16 = arith.constant 5.000000e-01 : f32
    %56 = vector.broadcast %cst_16 : f32 to vector<8x96xf32>
    %57 = arith.addf %55, %56 : vector<8x96xf32>
    %58 = vector.extract_strided_slice %57 {offsets = [0, 32], sizes = [8, 32], strides = [1, 1]} : vector<8x96xf32> to vector<8x32xf32>
    %59 = arith.mulf %58, %17 : vector<8x32xf32>
    %60 = vector.extract_strided_slice %57 {offsets = [0, 0], sizes = [8, 32], strides = [1, 1]} : vector<8x96xf32> to vector<8x32xf32>
    %61 = vector.extract_strided_slice %52 {offsets = [0, 96], sizes = [8, 32], strides = [1, 1]} : vector<8x128xf32> to vector<8x32xf32>
    %62 = arith.mulf %60, %61 : vector<8x32xf32>
    %63 = arith.addf %59, %62 : vector<8x32xf32>
    %64 = vector.extract_strided_slice %57 {offsets = [0, 64], sizes = [8, 32], strides = [1, 1]} : vector<8x96xf32> to vector<8x32xf32>
    %65 = math.tanh %63 : vector<8x32xf32>
    %66 = arith.mulf %64, %65 : vector<8x32xf32>
    %67 = tpu.concatenate %66, %42 in 1 : vector<8x32xf32>, vector<8x32xf32> -> vector<8x64xf32>
    %c0_17 = arith.constant 0 : index
    %c0_18 = arith.constant 0 : index
    %68 = vector.load %arg2[%c0_17, %c0_18] : memref<64x256xf32, #tpu.memory_space<vmem>>, vector<64x256xf32>
    %cst_19 = arith.constant dense<0.000000e+00> : vector<8x256xf32>
    %69 = tpu.matmul %67, %68, %cst_19 {dimension_numbers = #tpu.dot_dimension_numbers<[1], [0], [0], [1], [0, 0, 1, 1], [], []>} : vector<8x64xf32>, vector<64x256xf32>, vector<8x256xf32> -> vector<8x256xf32>
    %70 = vector.extract_strided_slice %69 {offsets = [0, 0], sizes = [8, 128], strides = [1, 1]} : vector<8x256xf32> to vector<8x128xf32>
    %c0_20 = arith.constant 0 : index
    %c0_21 = arith.constant 0 : index
    %71 = vector.load %arg3[%c0_20, %c0_21] : memref<8x128xf32, #tpu.memory_space<vmem>>, vector<8x128xf32>
    %72 = arith.addf %70, %71 : vector<8x128xf32>
    %73 = vector.extract_strided_slice %69 {offsets = [0, 128], sizes = [8, 128], strides = [1, 1]} : vector<8x256xf32> to vector<8x128xf32>
    %74 = math.tanh %72 : vector<8x128xf32>
    %75 = vector.extract_strided_slice %74 {offsets = [0, 0], sizes = [8, 96], strides = [1, 1]} : vector<8x128xf32> to vector<8x96xf32>
    %cst_22 = arith.constant 5.000000e-01 : f32
    %76 = vector.broadcast %cst_22 : f32 to vector<8x96xf32>
    %77 = arith.mulf %76, %75 : vector<8x96xf32>
    %cst_23 = arith.constant 5.000000e-01 : f32
    %78 = vector.broadcast %cst_23 : f32 to vector<8x96xf32>
    %79 = arith.addf %77, %78 : vector<8x96xf32>
    %80 = vector.extract_strided_slice %79 {offsets = [0, 32], sizes = [8, 32], strides = [1, 1]} : vector<8x96xf32> to vector<8x32xf32>
    %81 = arith.mulf %80, %39 : vector<8x32xf32>
    %82 = vector.extract_strided_slice %79 {offsets = [0, 0], sizes = [8, 32], strides = [1, 1]} : vector<8x96xf32> to vector<8x32xf32>
    %83 = vector.extract_strided_slice %74 {offsets = [0, 96], sizes = [8, 32], strides = [1, 1]} : vector<8x128xf32> to vector<8x32xf32>
    %84 = arith.mulf %82, %83 : vector<8x32xf32>
    %85 = arith.addf %81, %84 : vector<8x32xf32>
    %86 = vector.extract_strided_slice %79 {offsets = [0, 64], sizes = [8, 32], strides = [1, 1]} : vector<8x96xf32> to vector<8x32xf32>
    %87 = math.tanh %85 : vector<8x32xf32>
    %88 = arith.mulf %86, %87 : vector<8x32xf32>
    %89 = arith.index_cast %c1_i32 : i32 to index
    %c0_24 = arith.constant 0 : index
    %c0_25 = arith.constant 0 : index
    %90 = vector.load %arg1[%89, %c0_24, %c0_25] : memref<9x8x32xf32, #tpu.memory_space<vmem>>, vector<1x8x32xf32>
    %91 = vector.shape_cast %90 : vector<1x8x32xf32> to vector<8x32xf32>
    %92 = arith.mulf %91, %88 : vector<8x32xf32>
    %93 = arith.addf %47, %92 : vector<8x32xf32>
    %c2_i32 = arith.constant 2 : i32
    %94 = arith.index_cast %c2_i32 : i32 to index
    %c0_26 = arith.constant 0 : index
    %c0_27 = arith.constant 0 : index
    %95 = vector.load %arg0[%94, %c0_26, %c0_27] : memref<9x8x128xf32, #tpu.memory_space<vmem>>, vector<1x8x128xf32>
    %96 = vector.shape_cast %95 : vector<1x8x128xf32> to vector<8x128xf32>
    %97 = arith.addf %96, %73 : vector<8x128xf32>
    %98 = math.tanh %97 : vector<8x128xf32>
    %99 = vector.extract_strided_slice %98 {offsets = [0, 0], sizes = [8, 96], strides = [1, 1]} : vector<8x128xf32> to vector<8x96xf32>
    %cst_28 = arith.constant 5.000000e-01 : f32
    %100 = vector.broadcast %cst_28 : f32 to vector<8x96xf32>
    %101 = arith.mulf %100, %99 : vector<8x96xf32>
    %cst_29 = arith.constant 5.000000e-01 : f32
    %102 = vector.broadcast %cst_29 : f32 to vector<8x96xf32>
    %103 = arith.addf %101, %102 : vector<8x96xf32>
    %104 = vector.extract_strided_slice %103 {offsets = [0, 32], sizes = [8, 32], strides = [1, 1]} : vector<8x96xf32> to vector<8x32xf32>
    %105 = arith.mulf %104, %63 : vector<8x32xf32>
    %106 = vector.extract_strided_slice %103 {offsets = [0, 0], sizes = [8, 32], strides = [1, 1]} : vector<8x96xf32> to vector<8x32xf32>
    %107 = vector.extract_strided_slice %98 {offsets = [0, 96], sizes = [8, 32], strides = [1, 1]} : vector<8x128xf32> to vector<8x32xf32>
    %108 = arith.mulf %106, %107 : vector<8x32xf32>
    %109 = arith.addf %105, %108 : vector<8x32xf32>
    %110 = vector.extract_strided_slice %103 {offsets = [0, 64], sizes = [8, 32], strides = [1, 1]} : vector<8x96xf32> to vector<8x32xf32>
    %111 = math.tanh %109 : vector<8x32xf32>
    %112 = arith.mulf %110, %111 : vector<8x32xf32>
    %113 = tpu.concatenate %112, %88 in 1 : vector<8x32xf32>, vector<8x32xf32> -> vector<8x64xf32>
    %c0_30 = arith.constant 0 : index
    %c0_31 = arith.constant 0 : index
    %114 = vector.load %arg2[%c0_30, %c0_31] : memref<64x256xf32, #tpu.memory_space<vmem>>, vector<64x256xf32>
    %cst_32 = arith.constant dense<0.000000e+00> : vector<8x256xf32>
    %115 = tpu.matmul %113, %114, %cst_32 {dimension_numbers = #tpu.dot_dimension_numbers<[1], [0], [0], [1], [0, 0, 1, 1], [], []>} : vector<8x64xf32>, vector<64x256xf32>, vector<8x256xf32> -> vector<8x256xf32>
    %116 = vector.extract_strided_slice %115 {offsets = [0, 0], sizes = [8, 128], strides = [1, 1]} : vector<8x256xf32> to vector<8x128xf32>
    %c0_33 = arith.constant 0 : index
    %c0_34 = arith.constant 0 : index
    %117 = vector.load %arg3[%c0_33, %c0_34] : memref<8x128xf32, #tpu.memory_space<vmem>>, vector<8x128xf32>
    %118 = arith.addf %116, %117 : vector<8x128xf32>
    %119 = vector.extract_strided_slice %115 {offsets = [0, 128], sizes = [8, 128], strides = [1, 1]} : vector<8x256xf32> to vector<8x128xf32>
    %120 = math.tanh %118 : vector<8x128xf32>
    %121 = vector.extract_strided_slice %120 {offsets = [0, 0], sizes = [8, 96], strides = [1, 1]} : vector<8x128xf32> to vector<8x96xf32>
    %cst_35 = arith.constant 5.000000e-01 : f32
    %122 = vector.broadcast %cst_35 : f32 to vector<8x96xf32>
    %123 = arith.mulf %122, %121 : vector<8x96xf32>
    %cst_36 = arith.constant 5.000000e-01 : f32
    %124 = vector.broadcast %cst_36 : f32 to vector<8x96xf32>
    %125 = arith.addf %123, %124 : vector<8x96xf32>
    %126 = vector.extract_strided_slice %125 {offsets = [0, 32], sizes = [8, 32], strides = [1, 1]} : vector<8x96xf32> to vector<8x32xf32>
    %127 = arith.mulf %126, %85 : vector<8x32xf32>
    %128 = vector.extract_strided_slice %125 {offsets = [0, 0], sizes = [8, 32], strides = [1, 1]} : vector<8x96xf32> to vector<8x32xf32>
    %129 = vector.extract_strided_slice %120 {offsets = [0, 96], sizes = [8, 32], strides = [1, 1]} : vector<8x128xf32> to vector<8x32xf32>
    %130 = arith.mulf %128, %129 : vector<8x32xf32>
    %131 = arith.addf %127, %130 : vector<8x32xf32>
    %132 = vector.extract_strided_slice %125 {offsets = [0, 64], sizes = [8, 32], strides = [1, 1]} : vector<8x96xf32> to vector<8x32xf32>
    %133 = math.tanh %131 : vector<8x32xf32>
    %134 = arith.mulf %132, %133 : vector<8x32xf32>
    %135 = arith.index_cast %c2_i32 : i32 to index
    %c0_37 = arith.constant 0 : index
    %c0_38 = arith.constant 0 : index
    %136 = vector.load %arg1[%135, %c0_37, %c0_38] : memref<9x8x32xf32, #tpu.memory_space<vmem>>, vector<1x8x32xf32>
    %137 = vector.shape_cast %136 : vector<1x8x32xf32> to vector<8x32xf32>
    %138 = arith.mulf %137, %134 : vector<8x32xf32>
    %139 = arith.addf %93, %138 : vector<8x32xf32>
    %c3_i32 = arith.constant 3 : i32
    %140 = arith.index_cast %c3_i32 : i32 to index
    %c0_39 = arith.constant 0 : index
    %c0_40 = arith.constant 0 : index
    %141 = vector.load %arg0[%140, %c0_39, %c0_40] : memref<9x8x128xf32, #tpu.memory_space<vmem>>, vector<1x8x128xf32>
    %142 = vector.shape_cast %141 : vector<1x8x128xf32> to vector<8x128xf32>
    %143 = arith.addf %142, %119 : vector<8x128xf32>
    %144 = math.tanh %143 : vector<8x128xf32>
    %145 = vector.extract_strided_slice %144 {offsets = [0, 0], sizes = [8, 96], strides = [1, 1]} : vector<8x128xf32> to vector<8x96xf32>
    %cst_41 = arith.constant 5.000000e-01 : f32
    %146 = vector.broadcast %cst_41 : f32 to vector<8x96xf32>
    %147 = arith.mulf %146, %145 : vector<8x96xf32>
    %cst_42 = arith.constant 5.000000e-01 : f32
    %148 = vector.broadcast %cst_42 : f32 to vector<8x96xf32>
    %149 = arith.addf %147, %148 : vector<8x96xf32>
    %150 = vector.extract_strided_slice %149 {offsets = [0, 32], sizes = [8, 32], strides = [1, 1]} : vector<8x96xf32> to vector<8x32xf32>
    %151 = arith.mulf %150, %109 : vector<8x32xf32>
    %152 = vector.extract_strided_slice %149 {offsets = [0, 0], sizes = [8, 32], strides = [1, 1]} : vector<8x96xf32> to vector<8x32xf32>
    %153 = vector.extract_strided_slice %144 {offsets = [0, 96], sizes = [8, 32], strides = [1, 1]} : vector<8x128xf32> to vector<8x32xf32>
    %154 = arith.mulf %152, %153 : vector<8x32xf32>
    %155 = arith.addf %151, %154 : vector<8x32xf32>
    %156 = vector.extract_strided_slice %149 {offsets = [0, 64], sizes = [8, 32], strides = [1, 1]} : vector<8x96xf32> to vector<8x32xf32>
    %157 = math.tanh %155 : vector<8x32xf32>
    %158 = arith.mulf %156, %157 : vector<8x32xf32>
    %159 = tpu.concatenate %158, %134 in 1 : vector<8x32xf32>, vector<8x32xf32> -> vector<8x64xf32>
    %c0_43 = arith.constant 0 : index
    %c0_44 = arith.constant 0 : index
    %160 = vector.load %arg2[%c0_43, %c0_44] : memref<64x256xf32, #tpu.memory_space<vmem>>, vector<64x256xf32>
    %cst_45 = arith.constant dense<0.000000e+00> : vector<8x256xf32>
    %161 = tpu.matmul %159, %160, %cst_45 {dimension_numbers = #tpu.dot_dimension_numbers<[1], [0], [0], [1], [0, 0, 1, 1], [], []>} : vector<8x64xf32>, vector<64x256xf32>, vector<8x256xf32> -> vector<8x256xf32>
    %162 = vector.extract_strided_slice %161 {offsets = [0, 0], sizes = [8, 128], strides = [1, 1]} : vector<8x256xf32> to vector<8x128xf32>
    %c0_46 = arith.constant 0 : index
    %c0_47 = arith.constant 0 : index
    %163 = vector.load %arg3[%c0_46, %c0_47] : memref<8x128xf32, #tpu.memory_space<vmem>>, vector<8x128xf32>
    %164 = arith.addf %162, %163 : vector<8x128xf32>
    %165 = vector.extract_strided_slice %161 {offsets = [0, 128], sizes = [8, 128], strides = [1, 1]} : vector<8x256xf32> to vector<8x128xf32>
    %166 = math.tanh %164 : vector<8x128xf32>
    %167 = vector.extract_strided_slice %166 {offsets = [0, 0], sizes = [8, 96], strides = [1, 1]} : vector<8x128xf32> to vector<8x96xf32>
    %cst_48 = arith.constant 5.000000e-01 : f32
    %168 = vector.broadcast %cst_48 : f32 to vector<8x96xf32>
    %169 = arith.mulf %168, %167 : vector<8x96xf32>
    %cst_49 = arith.constant 5.000000e-01 : f32
    %170 = vector.broadcast %cst_49 : f32 to vector<8x96xf32>
    %171 = arith.addf %169, %170 : vector<8x96xf32>
    %172 = vector.extract_strided_slice %171 {offsets = [0, 32], sizes = [8, 32], strides = [1, 1]} : vector<8x96xf32> to vector<8x32xf32>
    %173 = arith.mulf %172, %131 : vector<8x32xf32>
    %174 = vector.extract_strided_slice %171 {offsets = [0, 0], sizes = [8, 32], strides = [1, 1]} : vector<8x96xf32> to vector<8x32xf32>
    %175 = vector.extract_strided_slice %166 {offsets = [0, 96], sizes = [8, 32], strides = [1, 1]} : vector<8x128xf32> to vector<8x32xf32>
    %176 = arith.mulf %174, %175 : vector<8x32xf32>
    %177 = arith.addf %173, %176 : vector<8x32xf32>
    %178 = vector.extract_strided_slice %171 {offsets = [0, 64], sizes = [8, 32], strides = [1, 1]} : vector<8x96xf32> to vector<8x32xf32>
    %179 = math.tanh %177 : vector<8x32xf32>
    %180 = arith.mulf %178, %179 : vector<8x32xf32>
    %181 = arith.index_cast %c3_i32 : i32 to index
    %c0_50 = arith.constant 0 : index
    %c0_51 = arith.constant 0 : index
    %182 = vector.load %arg1[%181, %c0_50, %c0_51] : memref<9x8x32xf32, #tpu.memory_space<vmem>>, vector<1x8x32xf32>
    %183 = vector.shape_cast %182 : vector<1x8x32xf32> to vector<8x32xf32>
    %184 = arith.mulf %183, %180 : vector<8x32xf32>
    %185 = arith.addf %139, %184 : vector<8x32xf32>
    %c4_i32 = arith.constant 4 : i32
    %186 = arith.index_cast %c4_i32 : i32 to index
    %c0_52 = arith.constant 0 : index
    %c0_53 = arith.constant 0 : index
    %187 = vector.load %arg0[%186, %c0_52, %c0_53] : memref<9x8x128xf32, #tpu.memory_space<vmem>>, vector<1x8x128xf32>
    %188 = vector.shape_cast %187 : vector<1x8x128xf32> to vector<8x128xf32>
    %189 = arith.addf %188, %165 : vector<8x128xf32>
    %190 = math.tanh %189 : vector<8x128xf32>
    %191 = vector.extract_strided_slice %190 {offsets = [0, 0], sizes = [8, 96], strides = [1, 1]} : vector<8x128xf32> to vector<8x96xf32>
    %cst_54 = arith.constant 5.000000e-01 : f32
    %192 = vector.broadcast %cst_54 : f32 to vector<8x96xf32>
    %193 = arith.mulf %192, %191 : vector<8x96xf32>
    %cst_55 = arith.constant 5.000000e-01 : f32
    %194 = vector.broadcast %cst_55 : f32 to vector<8x96xf32>
    %195 = arith.addf %193, %194 : vector<8x96xf32>
    %196 = vector.extract_strided_slice %195 {offsets = [0, 32], sizes = [8, 32], strides = [1, 1]} : vector<8x96xf32> to vector<8x32xf32>
    %197 = arith.mulf %196, %155 : vector<8x32xf32>
    %198 = vector.extract_strided_slice %195 {offsets = [0, 0], sizes = [8, 32], strides = [1, 1]} : vector<8x96xf32> to vector<8x32xf32>
    %199 = vector.extract_strided_slice %190 {offsets = [0, 96], sizes = [8, 32], strides = [1, 1]} : vector<8x128xf32> to vector<8x32xf32>
    %200 = arith.mulf %198, %199 : vector<8x32xf32>
    %201 = arith.addf %197, %200 : vector<8x32xf32>
    %202 = vector.extract_strided_slice %195 {offsets = [0, 64], sizes = [8, 32], strides = [1, 1]} : vector<8x96xf32> to vector<8x32xf32>
    %203 = math.tanh %201 : vector<8x32xf32>
    %204 = arith.mulf %202, %203 : vector<8x32xf32>
    %205 = tpu.concatenate %204, %180 in 1 : vector<8x32xf32>, vector<8x32xf32> -> vector<8x64xf32>
    %c0_56 = arith.constant 0 : index
    %c0_57 = arith.constant 0 : index
    %206 = vector.load %arg2[%c0_56, %c0_57] : memref<64x256xf32, #tpu.memory_space<vmem>>, vector<64x256xf32>
    %cst_58 = arith.constant dense<0.000000e+00> : vector<8x256xf32>
    %207 = tpu.matmul %205, %206, %cst_58 {dimension_numbers = #tpu.dot_dimension_numbers<[1], [0], [0], [1], [0, 0, 1, 1], [], []>} : vector<8x64xf32>, vector<64x256xf32>, vector<8x256xf32> -> vector<8x256xf32>
    %208 = vector.extract_strided_slice %207 {offsets = [0, 0], sizes = [8, 128], strides = [1, 1]} : vector<8x256xf32> to vector<8x128xf32>
    %c0_59 = arith.constant 0 : index
    %c0_60 = arith.constant 0 : index
    %209 = vector.load %arg3[%c0_59, %c0_60] : memref<8x128xf32, #tpu.memory_space<vmem>>, vector<8x128xf32>
    %210 = arith.addf %208, %209 : vector<8x128xf32>
    %211 = vector.extract_strided_slice %207 {offsets = [0, 128], sizes = [8, 128], strides = [1, 1]} : vector<8x256xf32> to vector<8x128xf32>
    %212 = math.tanh %210 : vector<8x128xf32>
    %213 = vector.extract_strided_slice %212 {offsets = [0, 0], sizes = [8, 96], strides = [1, 1]} : vector<8x128xf32> to vector<8x96xf32>
    %cst_61 = arith.constant 5.000000e-01 : f32
    %214 = vector.broadcast %cst_61 : f32 to vector<8x96xf32>
    %215 = arith.mulf %214, %213 : vector<8x96xf32>
    %cst_62 = arith.constant 5.000000e-01 : f32
    %216 = vector.broadcast %cst_62 : f32 to vector<8x96xf32>
    %217 = arith.addf %215, %216 : vector<8x96xf32>
    %218 = vector.extract_strided_slice %217 {offsets = [0, 32], sizes = [8, 32], strides = [1, 1]} : vector<8x96xf32> to vector<8x32xf32>
    %219 = arith.mulf %218, %177 : vector<8x32xf32>
    %220 = vector.extract_strided_slice %217 {offsets = [0, 0], sizes = [8, 32], strides = [1, 1]} : vector<8x96xf32> to vector<8x32xf32>
    %221 = vector.extract_strided_slice %212 {offsets = [0, 96], sizes = [8, 32], strides = [1, 1]} : vector<8x128xf32> to vector<8x32xf32>
    %222 = arith.mulf %220, %221 : vector<8x32xf32>
    %223 = arith.addf %219, %222 : vector<8x32xf32>
    %224 = vector.extract_strided_slice %217 {offsets = [0, 64], sizes = [8, 32], strides = [1, 1]} : vector<8x96xf32> to vector<8x32xf32>
    %225 = math.tanh %223 : vector<8x32xf32>
    %226 = arith.mulf %224, %225 : vector<8x32xf32>
    %227 = arith.index_cast %c4_i32 : i32 to index
    %c0_63 = arith.constant 0 : index
    %c0_64 = arith.constant 0 : index
    %228 = vector.load %arg1[%227, %c0_63, %c0_64] : memref<9x8x32xf32, #tpu.memory_space<vmem>>, vector<1x8x32xf32>
    %229 = vector.shape_cast %228 : vector<1x8x32xf32> to vector<8x32xf32>
    %230 = arith.mulf %229, %226 : vector<8x32xf32>
    %231 = arith.addf %185, %230 : vector<8x32xf32>
    %c5_i32 = arith.constant 5 : i32
    %232 = arith.index_cast %c5_i32 : i32 to index
    %c0_65 = arith.constant 0 : index
    %c0_66 = arith.constant 0 : index
    %233 = vector.load %arg0[%232, %c0_65, %c0_66] : memref<9x8x128xf32, #tpu.memory_space<vmem>>, vector<1x8x128xf32>
    %234 = vector.shape_cast %233 : vector<1x8x128xf32> to vector<8x128xf32>
    %235 = arith.addf %234, %211 : vector<8x128xf32>
    %236 = math.tanh %235 : vector<8x128xf32>
    %237 = vector.extract_strided_slice %236 {offsets = [0, 0], sizes = [8, 96], strides = [1, 1]} : vector<8x128xf32> to vector<8x96xf32>
    %cst_67 = arith.constant 5.000000e-01 : f32
    %238 = vector.broadcast %cst_67 : f32 to vector<8x96xf32>
    %239 = arith.mulf %238, %237 : vector<8x96xf32>
    %cst_68 = arith.constant 5.000000e-01 : f32
    %240 = vector.broadcast %cst_68 : f32 to vector<8x96xf32>
    %241 = arith.addf %239, %240 : vector<8x96xf32>
    %242 = vector.extract_strided_slice %241 {offsets = [0, 32], sizes = [8, 32], strides = [1, 1]} : vector<8x96xf32> to vector<8x32xf32>
    %243 = arith.mulf %242, %201 : vector<8x32xf32>
    %244 = vector.extract_strided_slice %241 {offsets = [0, 0], sizes = [8, 32], strides = [1, 1]} : vector<8x96xf32> to vector<8x32xf32>
    %245 = vector.extract_strided_slice %236 {offsets = [0, 96], sizes = [8, 32], strides = [1, 1]} : vector<8x128xf32> to vector<8x32xf32>
    %246 = arith.mulf %244, %245 : vector<8x32xf32>
    %247 = arith.addf %243, %246 : vector<8x32xf32>
    %248 = vector.extract_strided_slice %241 {offsets = [0, 64], sizes = [8, 32], strides = [1, 1]} : vector<8x96xf32> to vector<8x32xf32>
    %249 = math.tanh %247 : vector<8x32xf32>
    %250 = arith.mulf %248, %249 : vector<8x32xf32>
    %251 = tpu.concatenate %250, %226 in 1 : vector<8x32xf32>, vector<8x32xf32> -> vector<8x64xf32>
    %c0_69 = arith.constant 0 : index
    %c0_70 = arith.constant 0 : index
    %252 = vector.load %arg2[%c0_69, %c0_70] : memref<64x256xf32, #tpu.memory_space<vmem>>, vector<64x256xf32>
    %cst_71 = arith.constant dense<0.000000e+00> : vector<8x256xf32>
    %253 = tpu.matmul %251, %252, %cst_71 {dimension_numbers = #tpu.dot_dimension_numbers<[1], [0], [0], [1], [0, 0, 1, 1], [], []>} : vector<8x64xf32>, vector<64x256xf32>, vector<8x256xf32> -> vector<8x256xf32>
    %254 = vector.extract_strided_slice %253 {offsets = [0, 0], sizes = [8, 128], strides = [1, 1]} : vector<8x256xf32> to vector<8x128xf32>
    %c0_72 = arith.constant 0 : index
    %c0_73 = arith.constant 0 : index
    %255 = vector.load %arg3[%c0_72, %c0_73] : memref<8x128xf32, #tpu.memory_space<vmem>>, vector<8x128xf32>
    %256 = arith.addf %254, %255 : vector<8x128xf32>
    %257 = vector.extract_strided_slice %253 {offsets = [0, 128], sizes = [8, 128], strides = [1, 1]} : vector<8x256xf32> to vector<8x128xf32>
    %258 = math.tanh %256 : vector<8x128xf32>
    %259 = vector.extract_strided_slice %258 {offsets = [0, 0], sizes = [8, 96], strides = [1, 1]} : vector<8x128xf32> to vector<8x96xf32>
    %cst_74 = arith.constant 5.000000e-01 : f32
    %260 = vector.broadcast %cst_74 : f32 to vector<8x96xf32>
    %261 = arith.mulf %260, %259 : vector<8x96xf32>
    %cst_75 = arith.constant 5.000000e-01 : f32
    %262 = vector.broadcast %cst_75 : f32 to vector<8x96xf32>
    %263 = arith.addf %261, %262 : vector<8x96xf32>
    %264 = vector.extract_strided_slice %263 {offsets = [0, 32], sizes = [8, 32], strides = [1, 1]} : vector<8x96xf32> to vector<8x32xf32>
    %265 = arith.mulf %264, %223 : vector<8x32xf32>
    %266 = vector.extract_strided_slice %263 {offsets = [0, 0], sizes = [8, 32], strides = [1, 1]} : vector<8x96xf32> to vector<8x32xf32>
    %267 = vector.extract_strided_slice %258 {offsets = [0, 96], sizes = [8, 32], strides = [1, 1]} : vector<8x128xf32> to vector<8x32xf32>
    %268 = arith.mulf %266, %267 : vector<8x32xf32>
    %269 = arith.addf %265, %268 : vector<8x32xf32>
    %270 = vector.extract_strided_slice %263 {offsets = [0, 64], sizes = [8, 32], strides = [1, 1]} : vector<8x96xf32> to vector<8x32xf32>
    %271 = math.tanh %269 : vector<8x32xf32>
    %272 = arith.mulf %270, %271 : vector<8x32xf32>
    %273 = arith.index_cast %c5_i32 : i32 to index
    %c0_76 = arith.constant 0 : index
    %c0_77 = arith.constant 0 : index
    %274 = vector.load %arg1[%273, %c0_76, %c0_77] : memref<9x8x32xf32, #tpu.memory_space<vmem>>, vector<1x8x32xf32>
    %275 = vector.shape_cast %274 : vector<1x8x32xf32> to vector<8x32xf32>
    %276 = arith.mulf %275, %272 : vector<8x32xf32>
    %277 = arith.addf %231, %276 : vector<8x32xf32>
    %c6_i32 = arith.constant 6 : i32
    %278 = arith.index_cast %c6_i32 : i32 to index
    %c0_78 = arith.constant 0 : index
    %c0_79 = arith.constant 0 : index
    %279 = vector.load %arg0[%278, %c0_78, %c0_79] : memref<9x8x128xf32, #tpu.memory_space<vmem>>, vector<1x8x128xf32>
    %280 = vector.shape_cast %279 : vector<1x8x128xf32> to vector<8x128xf32>
    %281 = arith.addf %280, %257 : vector<8x128xf32>
    %282 = math.tanh %281 : vector<8x128xf32>
    %283 = vector.extract_strided_slice %282 {offsets = [0, 0], sizes = [8, 96], strides = [1, 1]} : vector<8x128xf32> to vector<8x96xf32>
    %cst_80 = arith.constant 5.000000e-01 : f32
    %284 = vector.broadcast %cst_80 : f32 to vector<8x96xf32>
    %285 = arith.mulf %284, %283 : vector<8x96xf32>
    %cst_81 = arith.constant 5.000000e-01 : f32
    %286 = vector.broadcast %cst_81 : f32 to vector<8x96xf32>
    %287 = arith.addf %285, %286 : vector<8x96xf32>
    %288 = vector.extract_strided_slice %287 {offsets = [0, 32], sizes = [8, 32], strides = [1, 1]} : vector<8x96xf32> to vector<8x32xf32>
    %289 = arith.mulf %288, %247 : vector<8x32xf32>
    %290 = vector.extract_strided_slice %287 {offsets = [0, 0], sizes = [8, 32], strides = [1, 1]} : vector<8x96xf32> to vector<8x32xf32>
    %291 = vector.extract_strided_slice %282 {offsets = [0, 96], sizes = [8, 32], strides = [1, 1]} : vector<8x128xf32> to vector<8x32xf32>
    %292 = arith.mulf %290, %291 : vector<8x32xf32>
    %293 = arith.addf %289, %292 : vector<8x32xf32>
    %294 = vector.extract_strided_slice %287 {offsets = [0, 64], sizes = [8, 32], strides = [1, 1]} : vector<8x96xf32> to vector<8x32xf32>
    %295 = math.tanh %293 : vector<8x32xf32>
    %296 = arith.mulf %294, %295 : vector<8x32xf32>
    %297 = tpu.concatenate %296, %272 in 1 : vector<8x32xf32>, vector<8x32xf32> -> vector<8x64xf32>
    %c0_82 = arith.constant 0 : index
    %c0_83 = arith.constant 0 : index
    %298 = vector.load %arg2[%c0_82, %c0_83] : memref<64x256xf32, #tpu.memory_space<vmem>>, vector<64x256xf32>
    %cst_84 = arith.constant dense<0.000000e+00> : vector<8x256xf32>
    %299 = tpu.matmul %297, %298, %cst_84 {dimension_numbers = #tpu.dot_dimension_numbers<[1], [0], [0], [1], [0, 0, 1, 1], [], []>} : vector<8x64xf32>, vector<64x256xf32>, vector<8x256xf32> -> vector<8x256xf32>
    %300 = vector.extract_strided_slice %299 {offsets = [0, 0], sizes = [8, 128], strides = [1, 1]} : vector<8x256xf32> to vector<8x128xf32>
    %c0_85 = arith.constant 0 : index
    %c0_86 = arith.constant 0 : index
    %301 = vector.load %arg3[%c0_85, %c0_86] : memref<8x128xf32, #tpu.memory_space<vmem>>, vector<8x128xf32>
    %302 = arith.addf %300, %301 : vector<8x128xf32>
    %303 = vector.extract_strided_slice %299 {offsets = [0, 128], sizes = [8, 128], strides = [1, 1]} : vector<8x256xf32> to vector<8x128xf32>
    %304 = math.tanh %302 : vector<8x128xf32>
    %305 = vector.extract_strided_slice %304 {offsets = [0, 0], sizes = [8, 96], strides = [1, 1]} : vector<8x128xf32> to vector<8x96xf32>
    %cst_87 = arith.constant 5.000000e-01 : f32
    %306 = vector.broadcast %cst_87 : f32 to vector<8x96xf32>
    %307 = arith.mulf %306, %305 : vector<8x96xf32>
    %cst_88 = arith.constant 5.000000e-01 : f32
    %308 = vector.broadcast %cst_88 : f32 to vector<8x96xf32>
    %309 = arith.addf %307, %308 : vector<8x96xf32>
    %310 = vector.extract_strided_slice %309 {offsets = [0, 32], sizes = [8, 32], strides = [1, 1]} : vector<8x96xf32> to vector<8x32xf32>
    %311 = arith.mulf %310, %269 : vector<8x32xf32>
    %312 = vector.extract_strided_slice %309 {offsets = [0, 0], sizes = [8, 32], strides = [1, 1]} : vector<8x96xf32> to vector<8x32xf32>
    %313 = vector.extract_strided_slice %304 {offsets = [0, 96], sizes = [8, 32], strides = [1, 1]} : vector<8x128xf32> to vector<8x32xf32>
    %314 = arith.mulf %312, %313 : vector<8x32xf32>
    %315 = arith.addf %311, %314 : vector<8x32xf32>
    %316 = vector.extract_strided_slice %309 {offsets = [0, 64], sizes = [8, 32], strides = [1, 1]} : vector<8x96xf32> to vector<8x32xf32>
    %317 = math.tanh %315 : vector<8x32xf32>
    %318 = arith.mulf %316, %317 : vector<8x32xf32>
    %319 = arith.index_cast %c6_i32 : i32 to index
    %c0_89 = arith.constant 0 : index
    %c0_90 = arith.constant 0 : index
    %320 = vector.load %arg1[%319, %c0_89, %c0_90] : memref<9x8x32xf32, #tpu.memory_space<vmem>>, vector<1x8x32xf32>
    %321 = vector.shape_cast %320 : vector<1x8x32xf32> to vector<8x32xf32>
    %322 = arith.mulf %321, %318 : vector<8x32xf32>
    %323 = arith.addf %277, %322 : vector<8x32xf32>
    %c7_i32 = arith.constant 7 : i32
    %324 = arith.index_cast %c7_i32 : i32 to index
    %c0_91 = arith.constant 0 : index
    %c0_92 = arith.constant 0 : index
    %325 = vector.load %arg0[%324, %c0_91, %c0_92] : memref<9x8x128xf32, #tpu.memory_space<vmem>>, vector<1x8x128xf32>
    %326 = vector.shape_cast %325 : vector<1x8x128xf32> to vector<8x128xf32>
    %327 = arith.addf %326, %303 : vector<8x128xf32>
    %328 = math.tanh %327 : vector<8x128xf32>
    %329 = vector.extract_strided_slice %328 {offsets = [0, 0], sizes = [8, 96], strides = [1, 1]} : vector<8x128xf32> to vector<8x96xf32>
    %cst_93 = arith.constant 5.000000e-01 : f32
    %330 = vector.broadcast %cst_93 : f32 to vector<8x96xf32>
    %331 = arith.mulf %330, %329 : vector<8x96xf32>
    %cst_94 = arith.constant 5.000000e-01 : f32
    %332 = vector.broadcast %cst_94 : f32 to vector<8x96xf32>
    %333 = arith.addf %331, %332 : vector<8x96xf32>
    %334 = vector.extract_strided_slice %333 {offsets = [0, 32], sizes = [8, 32], strides = [1, 1]} : vector<8x96xf32> to vector<8x32xf32>
    %335 = arith.mulf %334, %293 : vector<8x32xf32>
    %336 = vector.extract_strided_slice %333 {offsets = [0, 0], sizes = [8, 32], strides = [1, 1]} : vector<8x96xf32> to vector<8x32xf32>
    %337 = vector.extract_strided_slice %328 {offsets = [0, 96], sizes = [8, 32], strides = [1, 1]} : vector<8x128xf32> to vector<8x32xf32>
    %338 = arith.mulf %336, %337 : vector<8x32xf32>
    %339 = arith.addf %335, %338 : vector<8x32xf32>
    %340 = vector.extract_strided_slice %333 {offsets = [0, 64], sizes = [8, 32], strides = [1, 1]} : vector<8x96xf32> to vector<8x32xf32>
    %341 = math.tanh %339 : vector<8x32xf32>
    %342 = arith.mulf %340, %341 : vector<8x32xf32>
    %343 = tpu.concatenate %342, %318 in 1 : vector<8x32xf32>, vector<8x32xf32> -> vector<8x64xf32>
    %c0_95 = arith.constant 0 : index
    %c0_96 = arith.constant 0 : index
    %344 = vector.load %arg2[%c0_95, %c0_96] : memref<64x256xf32, #tpu.memory_space<vmem>>, vector<64x256xf32>
    %cst_97 = arith.constant dense<0.000000e+00> : vector<8x256xf32>
    %345 = tpu.matmul %343, %344, %cst_97 {dimension_numbers = #tpu.dot_dimension_numbers<[1], [0], [0], [1], [0, 0, 1, 1], [], []>} : vector<8x64xf32>, vector<64x256xf32>, vector<8x256xf32> -> vector<8x256xf32>
    %346 = vector.extract_strided_slice %345 {offsets = [0, 0], sizes = [8, 128], strides = [1, 1]} : vector<8x256xf32> to vector<8x128xf32>
    %c0_98 = arith.constant 0 : index
    %c0_99 = arith.constant 0 : index
    %347 = vector.load %arg3[%c0_98, %c0_99] : memref<8x128xf32, #tpu.memory_space<vmem>>, vector<8x128xf32>
    %348 = arith.addf %346, %347 : vector<8x128xf32>
    %349 = vector.extract_strided_slice %345 {offsets = [0, 128], sizes = [8, 128], strides = [1, 1]} : vector<8x256xf32> to vector<8x128xf32>
    %350 = math.tanh %348 : vector<8x128xf32>
    %351 = vector.extract_strided_slice %350 {offsets = [0, 0], sizes = [8, 96], strides = [1, 1]} : vector<8x128xf32> to vector<8x96xf32>
    %cst_100 = arith.constant 5.000000e-01 : f32
    %352 = vector.broadcast %cst_100 : f32 to vector<8x96xf32>
    %353 = arith.mulf %352, %351 : vector<8x96xf32>
    %cst_101 = arith.constant 5.000000e-01 : f32
    %354 = vector.broadcast %cst_101 : f32 to vector<8x96xf32>
    %355 = arith.addf %353, %354 : vector<8x96xf32>
    %356 = vector.extract_strided_slice %355 {offsets = [0, 32], sizes = [8, 32], strides = [1, 1]} : vector<8x96xf32> to vector<8x32xf32>
    %357 = arith.mulf %356, %315 : vector<8x32xf32>
    %358 = vector.extract_strided_slice %355 {offsets = [0, 0], sizes = [8, 32], strides = [1, 1]} : vector<8x96xf32> to vector<8x32xf32>
    %359 = vector.extract_strided_slice %350 {offsets = [0, 96], sizes = [8, 32], strides = [1, 1]} : vector<8x128xf32> to vector<8x32xf32>
    %360 = arith.mulf %358, %359 : vector<8x32xf32>
    %361 = arith.addf %357, %360 : vector<8x32xf32>
    %362 = vector.extract_strided_slice %355 {offsets = [0, 64], sizes = [8, 32], strides = [1, 1]} : vector<8x96xf32> to vector<8x32xf32>
    %363 = math.tanh %361 : vector<8x32xf32>
    %364 = arith.mulf %362, %363 : vector<8x32xf32>
    %365 = arith.index_cast %c7_i32 : i32 to index
    %c0_102 = arith.constant 0 : index
    %c0_103 = arith.constant 0 : index
    %366 = vector.load %arg1[%365, %c0_102, %c0_103] : memref<9x8x32xf32, #tpu.memory_space<vmem>>, vector<1x8x32xf32>
    %367 = vector.shape_cast %366 : vector<1x8x32xf32> to vector<8x32xf32>
    %368 = arith.mulf %367, %364 : vector<8x32xf32>
    %369 = arith.addf %323, %368 : vector<8x32xf32>
    %c8_i32 = arith.constant 8 : i32
    %370 = arith.index_cast %c8_i32 : i32 to index
    %c0_104 = arith.constant 0 : index
    %c0_105 = arith.constant 0 : index
    %371 = vector.load %arg0[%370, %c0_104, %c0_105] : memref<9x8x128xf32, #tpu.memory_space<vmem>>, vector<1x8x128xf32>
    %372 = vector.shape_cast %371 : vector<1x8x128xf32> to vector<8x128xf32>
    %373 = arith.addf %372, %349 : vector<8x128xf32>
    %374 = math.tanh %373 : vector<8x128xf32>
    %375 = vector.extract_strided_slice %374 {offsets = [0, 0], sizes = [8, 96], strides = [1, 1]} : vector<8x128xf32> to vector<8x96xf32>
    %cst_106 = arith.constant 5.000000e-01 : f32
    %376 = vector.broadcast %cst_106 : f32 to vector<8x96xf32>
    %377 = arith.mulf %376, %375 : vector<8x96xf32>
    %cst_107 = arith.constant 5.000000e-01 : f32
    %378 = vector.broadcast %cst_107 : f32 to vector<8x96xf32>
    %379 = arith.addf %377, %378 : vector<8x96xf32>
    %380 = vector.extract_strided_slice %379 {offsets = [0, 32], sizes = [8, 32], strides = [1, 1]} : vector<8x96xf32> to vector<8x32xf32>
    %381 = arith.mulf %380, %339 : vector<8x32xf32>
    %382 = vector.extract_strided_slice %379 {offsets = [0, 0], sizes = [8, 32], strides = [1, 1]} : vector<8x96xf32> to vector<8x32xf32>
    %383 = vector.extract_strided_slice %374 {offsets = [0, 96], sizes = [8, 32], strides = [1, 1]} : vector<8x128xf32> to vector<8x32xf32>
    %384 = arith.mulf %382, %383 : vector<8x32xf32>
    %385 = arith.addf %381, %384 : vector<8x32xf32>
    %386 = vector.extract_strided_slice %379 {offsets = [0, 64], sizes = [8, 32], strides = [1, 1]} : vector<8x96xf32> to vector<8x32xf32>
    %387 = math.tanh %385 : vector<8x32xf32>
    %388 = arith.mulf %386, %387 : vector<8x32xf32>
    %389 = tpu.concatenate %388, %364 in 1 : vector<8x32xf32>, vector<8x32xf32> -> vector<8x64xf32>
    %c0_108 = arith.constant 0 : index
    %c0_109 = arith.constant 0 : index
    %390 = vector.load %arg2[%c0_108, %c0_109] : memref<64x256xf32, #tpu.memory_space<vmem>>, vector<64x256xf32>
    %cst_110 = arith.constant dense<0.000000e+00> : vector<8x256xf32>
    %391 = tpu.matmul %389, %390, %cst_110 {dimension_numbers = #tpu.dot_dimension_numbers<[1], [0], [0], [1], [0, 0, 1, 1], [], []>} : vector<8x64xf32>, vector<64x256xf32>, vector<8x256xf32> -> vector<8x256xf32>
    %392 = vector.extract_strided_slice %391 {offsets = [0, 0], sizes = [8, 128], strides = [1, 1]} : vector<8x256xf32> to vector<8x128xf32>
    %c0_111 = arith.constant 0 : index
    %c0_112 = arith.constant 0 : index
    %393 = vector.load %arg3[%c0_111, %c0_112] : memref<8x128xf32, #tpu.memory_space<vmem>>, vector<8x128xf32>
    %394 = arith.addf %392, %393 : vector<8x128xf32>
    %395 = vector.extract_strided_slice %391 {offsets = [0, 128], sizes = [8, 128], strides = [1, 1]} : vector<8x256xf32> to vector<8x128xf32>
    %396 = math.tanh %394 : vector<8x128xf32>
    %397 = vector.extract_strided_slice %396 {offsets = [0, 0], sizes = [8, 96], strides = [1, 1]} : vector<8x128xf32> to vector<8x96xf32>
    %cst_113 = arith.constant 5.000000e-01 : f32
    %398 = vector.broadcast %cst_113 : f32 to vector<8x96xf32>
    %399 = arith.mulf %398, %397 : vector<8x96xf32>
    %cst_114 = arith.constant 5.000000e-01 : f32
    %400 = vector.broadcast %cst_114 : f32 to vector<8x96xf32>
    %401 = arith.addf %399, %400 : vector<8x96xf32>
    %402 = vector.extract_strided_slice %401 {offsets = [0, 32], sizes = [8, 32], strides = [1, 1]} : vector<8x96xf32> to vector<8x32xf32>
    %403 = arith.mulf %402, %361 : vector<8x32xf32>
    %404 = vector.extract_strided_slice %401 {offsets = [0, 0], sizes = [8, 32], strides = [1, 1]} : vector<8x96xf32> to vector<8x32xf32>
    %405 = vector.extract_strided_slice %396 {offsets = [0, 96], sizes = [8, 32], strides = [1, 1]} : vector<8x128xf32> to vector<8x32xf32>
    %406 = arith.mulf %404, %405 : vector<8x32xf32>
    %407 = arith.addf %403, %406 : vector<8x32xf32>
    %408 = vector.extract_strided_slice %401 {offsets = [0, 64], sizes = [8, 32], strides = [1, 1]} : vector<8x96xf32> to vector<8x32xf32>
    %409 = math.tanh %407 : vector<8x32xf32>
    %410 = arith.mulf %408, %409 : vector<8x32xf32>
    %411 = arith.index_cast %c8_i32 : i32 to index
    %c0_115 = arith.constant 0 : index
    %c0_116 = arith.constant 0 : index
    %412 = vector.load %arg1[%411, %c0_115, %c0_116] : memref<9x8x32xf32, #tpu.memory_space<vmem>>, vector<1x8x32xf32>
    %413 = vector.shape_cast %412 : vector<1x8x32xf32> to vector<8x32xf32>
    %414 = arith.mulf %413, %410 : vector<8x32xf32>
    %415 = arith.addf %369, %414 : vector<8x32xf32>
    %c9_i32 = arith.constant 9 : i32
    %c0_117 = arith.constant 0 : index
    %c0_118 = arith.constant 0 : index
    %416 = vector.load %arg4[%c0_117, %c0_118] : memref<32x32xf32, #tpu.memory_space<vmem>>, vector<32x32xf32>
    %cst_119 = arith.constant dense<0.000000e+00> : vector<8x32xf32>
    %417 = tpu.matmul %415, %416, %cst_119 {dimension_numbers = #tpu.dot_dimension_numbers<[1], [0], [0], [1], [0, 0, 1, 1], [], []>} : vector<8x32xf32>, vector<32x32xf32>, vector<8x32xf32> -> vector<8x32xf32>
    %c0_120 = arith.constant 0 : index
    %c0_121 = arith.constant 0 : index
    %418 = vector.load %arg5[%c0_120, %c0_121] : memref<1x32xf32, #tpu.memory_space<vmem>>, vector<1x32xf32>
    %419 = vector.broadcast %418 : vector<1x32xf32> to vector<8x32xf32>
    %420 = arith.addf %417, %419 : vector<8x32xf32>
    %cst_122 = arith.constant 0.000000e+00 : f32
    %421 = vector.broadcast %cst_122 : f32 to vector<8x32xf32>
    %422 = arith.cmpf ogt, %420, %421 : vector<8x32xf32>
    %cst_123 = arith.constant 0.00999999977 : f32
    %423 = vector.broadcast %cst_123 : f32 to vector<8x32xf32>
    %424 = arith.mulf %423, %420 : vector<8x32xf32>
    %425 = arith.select %422, %420, %424 : vector<8x32xi1>, vector<8x32xf32>
    %c0_124 = arith.constant 0 : index
    %c0_125 = arith.constant 0 : index
    %426 = vector.load %arg6[%c0_124, %c0_125] : memref<32x128xf32, #tpu.memory_space<vmem>>, vector<32x128xf32>
    %cst_126 = arith.constant dense<0.000000e+00> : vector<8x128xf32>
    %427 = tpu.matmul %425, %426, %cst_126 {dimension_numbers = #tpu.dot_dimension_numbers<[1], [0], [0], [1], [0, 0, 1, 1], [], []>} : vector<8x32xf32>, vector<32x128xf32>, vector<8x128xf32> -> vector<8x128xf32>
    %c0_127 = arith.constant 0 : index
    %c0_128 = arith.constant 0 : index
    %428 = vector.load %arg7[%c0_127, %c0_128] : memref<1x128xf32, #tpu.memory_space<vmem>>, vector<1x128xf32>
    %429 = vector.broadcast %428 : vector<1x128xf32> to vector<8x128xf32>
    %430 = arith.addf %427, %429 : vector<8x128xf32>
    %c0_129 = arith.constant 0 : index
    %c0_130 = arith.constant 0 : index
    %431 = vector.load %arg8[%c0_129, %c0_130] : memref<8x128xf32, #tpu.memory_space<vmem>>, vector<8x128xf32>
    tpu.vector_store %arg8[%c0_129, %c0_130], %430 {strides = array<i32>} : memref<8x128xf32, #tpu.memory_space<vmem>>, vector<8x128xf32>,
    return
  }
}

</mosaic_0001>

<llo_original>
// kernel: tpu_custom_call.1
$region0: #{tpu_custom_call.1}
  #allocation0 [shape = 'u32[]', space=smem, size = 0x4, offset = 0x4, fixed_abs, tag = 'smem constant byte address 0x4 - core index']
  #allocation1 [shape = 'u32[144,128]{1,0:T(1,128)}', space=vmem, size = 0x12000, scoped, tag = 'internal scratch']
  %s0 = inlined_call_operand.hbm [shape: f32[9,8,128], index: 0, kind: input, shape index: {}]
  %s1 = inlined_call_operand.hbm [shape: f32[9,8,32], index: 1, kind: input, shape index: {}]
  %s2 = inlined_call_operand.hbm [shape: f32[64,256], index: 2, kind: input, shape index: {}]
  %s3 = inlined_call_operand.vmem [shape: f32[8,128], index: 3, kind: input, shape index: {}]
  %s4 = inlined_call_operand.hbm [shape: f32[32,32], index: 4, kind: input, shape index: {}]
  %s5 = inlined_call_operand.vmem [shape: f32[1,32], index: 5, kind: input, shape index: {}]
  %s6 = inlined_call_operand.hbm [shape: f32[32,128], index: 6, kind: input, shape index: {}]
  %s7 = inlined_call_operand.vmem [shape: f32[1,128], index: 7, kind: input, shape index: {}]
  %s8 = inlined_call_operand.hbm [shape: f32[8,128], index: 8, kind: output, shape index: {}]
  %s9 = sld [smem:[#allocation0]]
  $region62: #{tpu_custom_call.1} parent=0
    _
  %s11 = ssub.s32 1, %s9
  %s12 = scalar_select 0, %s11, %s9
  $region1: #{tpu_custom_call.1} parent=0
    #allocation2 [shape = 'u8[36864]{0}', space=vmem, size = 0x9000, scoped, tag = 'input window, operand 0, single buffered']
    #allocation3 [shape = 's32[1]{0}', space=sflag, size = 0x4, scoped, tag = 'scoped memory for tpu_custom_call.1']
    #allocation4 [shape = 's32[1]{0}', space=sflag, size = 0x4, scoped, tag = 'scoped memory for tpu_custom_call.1']
    #allocation5 [shape = 'u8[36864]{0}', space=vmem, size = 0x9000, scoped, tag = 'input window, operand 1, single buffered']
    #allocation6 [shape = 's32[1]{0}', space=sflag, size = 0x4, scoped, tag = 'scoped memory for tpu_custom_call.1']
    #allocation7 [shape = 'u8[65536]{0}', space=vmem, size = 0x10000, scoped, tag = 'input window, operand 2, single buffered']
    #allocation8 [shape = 'u8[16384]{0}', space=vmem, size = 0x4000, scoped, tag = 'input window, operand 4, single buffered']
    #allocation9 [shape = 's32[1]{0}', space=sflag, size = 0x4, scoped, tag = 'scoped memory for tpu_custom_call.1']
    #allocation10 [shape = 'u8[16384]{0}', space=vmem, size = 0x4000, scoped, tag = 'input window, operand 6, single buffered']
    #allocation11 [shape = 'u8[4096]{0}', space=vmem, size = 0x1000, scoped, tag = 'output window, operand 0, single buffered']
    %13 = vsyncpa [#allocation3], 0
    %14 = vsyncpa [#allocation6], 0
    %15 = vsyncpa [#allocation9], 0
    %16 = vsyncpa [#allocation4], 0
    // Predicated region
    $region2: #{tpu_custom_call.1} parent=1 // pred_check
      _
    $region3: #{tpu_custom_call.1} parent=1 // pred_check_branch
      %18 = sbr.rel (0) target = $region5
    $region4: #{tpu_custom_call.1} parent=1 // pred_region
      %s20 = ssub.s32 1152, 1152
      %21 = vsyncadd [#allocation3], %s20
      %s22 = sshll.u32 [#allocation2], 4
      %s23 = int_to_ptr.vmem [resolvable:$true] %s22
      %28 = dma.hbm_to_vmem [thread:$0]  %s0, 1152, %s23, [#allocation3], 128, 128, 8
    $region5: #{tpu_custom_call.1} parent=1 // pred_fallthru
      _
    // Predicated region
    $region6: #{tpu_custom_call.1} parent=1 // pred_check
      _
    $region7: #{tpu_custom_call.1} parent=1 // pred_check_branch
      %30 = sbr.rel (0) target = $region9
    $region8: #{tpu_custom_call.1} parent=1 // pred_region
      %s32 = ssub.s32 1152, 1152
      %33 = vsyncadd [#allocation6], %s32
      %s34 = sshll.u32 [#allocation5], 4
      %s35 = int_to_ptr.vmem [resolvable:$true] %s34
      %40 = dma.hbm_to_vmem [thread:$0]  %s1, 1152, %s35, [#allocation6], 128, 128, 8
    $region9: #{tpu_custom_call.1} parent=1 // pred_fallthru
      _
    // Predicated region
    $region10: #{tpu_custom_call.1} parent=1 // pred_check
      _
    $region11: #{tpu_custom_call.1} parent=1 // pred_check_branch
      %42 = sbr.rel (0) target = $region13
    $region12: #{tpu_custom_call.1} parent=1 // pred_region
      %s44 = ssub.s32 2048, 2048
      %45 = vsyncadd [#allocation6], %s44
      %s46 = sshll.u32 [#allocation7], 4
      %s47 = int_to_ptr.vmem [resolvable:$true] %s46
      %52 = dma.hbm_to_vmem [thread:$0]  %s2, 2048, %s47, [#allocation6], 256, 256, 16
    $region13: #{tpu_custom_call.1} parent=1 // pred_fallthru
      _
    // Predicated region
    $region14: #{tpu_custom_call.1} parent=1 // pred_check
      _
    $region15: #{tpu_custom_call.1} parent=1 // pred_check_branch
      %54 = sbr.rel (0) target = $region17
    $region16: #{tpu_custom_call.1} parent=1 // pred_region
      _
    $region17: #{tpu_custom_call.1} parent=1 // pred_fallthru
      _
    // Predicated region
    $region18: #{tpu_custom_call.1} parent=1 // pred_check
      _
    $region19: #{tpu_custom_call.1} parent=1 // pred_check_branch
      %56 = sbr.rel (0) target = $region21
    $region20: #{tpu_custom_call.1} parent=1 // pred_region
      %s58 = ssub.s32 512, 512
      %59 = vsyncadd [#allocation9], %s58
      %s60 = sshll.u32 [#allocation8], 4
      %s61 = int_to_ptr.vmem [resolvable:$true] %s60
      %66 = dma.hbm_to_vmem [thread:$0]  %s4, 512, %s61, [#allocation9], 128, 128, 8
    $region21: #{tpu_custom_call.1} parent=1 // pred_fallthru
      _
    // Predicated region
    $region22: #{tpu_custom_call.1} parent=1 // pred_check
      _
    $region23: #{tpu_custom_call.1} parent=1 // pred_check_branch
      %68 = sbr.rel (0) target = $region25
    $region24: #{tpu_custom_call.1} parent=1 // pred_region
      _
    $region25: #{tpu_custom_call.1} parent=1 // pred_fallthru
      _
    // Predicated region
    $region26: #{tpu_custom_call.1} parent=1 // pred_check
      _
    $region27: #{tpu_custom_call.1} parent=1 // pred_check_branch
      %70 = sbr.rel (0) target = $region29
    $region28: #{tpu_custom_call.1} parent=1 // pred_region
      %s72 = ssub.s32 512, 512
      %73 = vsyncadd [#allocation9], %s72
      %s74 = sshll.u32 [#allocation10], 4
      %s75 = int_to_ptr.vmem [resolvable:$true] %s74
      %80 = dma.hbm_to_vmem [thread:$0]  %s6, 512, %s75, [#allocation9], 128, 128, 8
    $region29: #{tpu_custom_call.1} parent=1 // pred_fallthru
      _
    // Predicated region
    $region30: #{tpu_custom_call.1} parent=1 // pred_check
      _
    $region31: #{tpu_custom_call.1} parent=1 // pred_check_branch
      %82 = sbr.rel (0) target = $region33
    $region32: #{tpu_custom_call.1} parent=1 // pred_region
      _
    $region33: #{tpu_custom_call.1} parent=1 // pred_fallthru
      _
    // Predicated region
    $region34: #{tpu_custom_call.1} parent=1 // pred_check
      _
    $region35: #{tpu_custom_call.1} parent=1 // pred_check_branch
      %84 = sbr.rel (0) target = $region37
    $region36: #{tpu_custom_call.1} parent=1 // pred_region
      %85 = dma.done [#allocation3], 1152
    $region37: #{tpu_custom_call.1} parent=1 // pred_fallthru
      _
    // Predicated region
    $region38: #{tpu_custom_call.1} parent=1 // pred_check
      _
    $region39: #{tpu_custom_call.1} parent=1 // pred_check_branch
      %87 = sbr.rel (0) target = $region41
    $region40: #{tpu_custom_call.1} parent=1 // pred_region
      %88 = dma.done [#allocation6], 1152
    $region41: #{tpu_custom_call.1} parent=1 // pred_fallthru
      _
    // Predicated region
    $region42: #{tpu_custom_call.1} parent=1 // pred_check
      _
    $region43: #{tpu_custom_call.1} parent=1 // pred_check_branch
      %90 = sbr.rel (0) target = $region45
    $region44: #{tpu_custom_call.1} parent=1 // pred_region
      %91 = dma.done [#allocation6], 2048
    $region45: #{tpu_custom_call.1} parent=1 // pred_fallthru
      _
    // Predicated region
    $region46: #{tpu_custom_call.1} parent=1 // pred_check
      _
    $region47: #{tpu_custom_call.1} parent=1 // pred_check_branch
      %93 = sbr.rel (0) target = $region49
    $region48: #{tpu_custom_call.1} parent=1 // pred_region
      %94 = dma.done [#allocation9], 512
    $region49: #{tpu_custom_call.1} parent=1 // pred_fallthru
      _
    // Predicated region
    $region50: #{tpu_custom_call.1} parent=1 // pred_check
      _
    $region51: #{tpu_custom_call.1} parent=1 // pred_check_branch
      %96 = sbr.rel (0) target = $region53
    $region52: #{tpu_custom_call.1} parent=1 // pred_region
      %97 = dma.done [#allocation9], 512
    $region53: #{tpu_custom_call.1} parent=1 // pred_fallthru
      _
    %v98 = vld [vmem:[#allocation2] sm:$0xff]
    %v99 = vadd.f32 %v98, 0.0
    %v100 = vtanh.pop %v99
    %v101 = vmul.f32 %v100, 0.5
    %v102 = vadd.f32 %v101, 0.5
    %v103 = vmul.f32 %v102, 0.0
    %105 = vrot.lane.b32.xlu0 %v100, 32
    %v106 = vpop.permute.xlu0 %105
    %v108 = vmul.f32 %v102, %v106
    %110 = vrot.lane.b32.xlu0 %v108, 32
    %v111 = vpop.permute.xlu0 %110
    %v113 = vadd.f32 %v103, %v111
    %v114 = vtanh.pop %v113
    %116 = vrot.lane.b32.xlu0 %v114, 32
    %v117 = vpop.permute.xlu0 %116
    %v119 = vmul.f32 %v102, %v117
    %121 = vrot.lane.b32.xlu0 %v119, 64
    %v122 = vpop.permute.xlu0 %121
    %vm124 = vcmask 261120
    %v125 = vsel %vm124, %v122, 0.0
    %v126 = vld [vmem:[#allocation7] sm:$0xff]
    %v127 = vld [vmem:[#allocation7 + $0x8] sm:$0xff]
    %v128 = vld [vmem:[#allocation7 + $0x10] sm:$0xff]
    %v129 = vld [vmem:[#allocation7 + $0x18] sm:$0xff]
    %v130 = vld [vmem:[#allocation7 + $0x20] sm:$0xff]
    %v131 = vld [vmem:[#allocation7 + $0x28] sm:$0xff]
    %v132 = vld [vmem:[#allocation7 + $0x30] sm:$0xff]
    %v133 = vld [vmem:[#allocation7 + $0x38] sm:$0xff]
    %v134 = vld [vmem:[#allocation7 + $0x40] sm:$0xff]
    %v135 = vld [vmem:[#allocation7 + $0x48] sm:$0xff]
    %v136 = vld [vmem:[#allocation7 + $0x50] sm:$0xff]
    %v137 = vld [vmem:[#allocation7 + $0x58] sm:$0xff]
    %v138 = vld [vmem:[#allocation7 + $0x60] sm:$0xff]
    %v139 = vld [vmem:[#allocation7 + $0x68] sm:$0xff]
    %v140 = vld [vmem:[#allocation7 + $0x70] sm:$0xff]
    %v141 = vld [vmem:[#allocation7 + $0x78] sm:$0xff]
    %vm142 = vcmask 523264
    %v144 = vsel %vm142, %v125, 0
    %146 = vmatprep.subr.mxu0 %v127
    %147 = vmatpush1.msra.mxu0 %v126
    %148 = vmatprep.subr.mxu0 %v129
    %149 = vmatpush1.msra.mxu0 %v128
    %150 = vmatprep.subr.mxu0 %v131
    %151 = vmatpush1.msra.mxu0 %v130
    %152 = vmatprep.subr.mxu0 %v133
    %153 = vmatpush1.msra.mxu0 %v132
    %154 = vmatprep.subr.mxu0 %v135
    %155 = vmatpush1.msra.mxu0 %v134
    %156 = vmatprep.subr.mxu0 %v137
    %157 = vmatpush1.msra.mxu0 %v136
    %158 = vmatprep.subr.mxu0 %v139
    %159 = vmatpush1.msra.mxu0 %v138
    %160 = vmatprep.subr.mxu0 %v141
    %161 = vmatpush1.msra.mxu0 %v140
    %162 = vmatprep.subr.mxu0 0.0
    %163 = vmatpush1.msra.mxu0 0.0
    %164 = vmatprep.subr.mxu0 0.0
    %165 = vmatpush1.msra.mxu0 0.0
    %166 = vmatprep.subr.mxu0 0.0
    %167 = vmatpush1.msra.mxu0 0.0
    %168 = vmatprep.subr.mxu0 0.0
    %169 = vmatpush1.msra.mxu0 0.0
    %170 = vmatprep.subr.mxu0 0.0
    %171 = vmatpush1.msra.mxu0 0.0
    %172 = vmatprep.subr.mxu0 0.0
    %173 = vmatpush1.msra.mxu0 0.0
    %174 = vmatprep.subr.mxu0 0.0
    %175 = vmatpush1.msra.mxu0 0.0
    %176 = vmatprep.subr.mxu0 0.0
    %177 = vmatpush1.msra.mxu0 0.0
    %178 = vmatprep.subr.mxu0 0.0
    %179 = vmatpush1.msra.mxu0 0.0
    %180 = vmatprep.subr.mxu0 0.0
    %181 = vmatpush1.msra.mxu0 0.0
    %182 = vmatprep.subr.mxu0 0.0
    %183 = vmatpush1.msra.mxu0 0.0
    %184 = vmatprep.subr.mxu0 0.0
    %185 = vmatpush1.msra.mxu0 0.0
    %186 = vmatprep.subr.mxu0 0.0
    %187 = vmatpush1.msra.mxu0 0.0
    %188 = vmatprep.subr.mxu0 0.0
    %189 = vmatpush1.msra.mxu0 0.0
    %190 = vmatprep.subr.mxu0 0.0
    %191 = vmatpush1.msra.mxu0 0.0
    %192 = vmatprep.subr.mxu0 0.0
    %193 = vmatpush1.msra.mxu0 0.0
    %194 = vmatprep.subr.mxu0 0.0
    %195 = vmatpush1.msra.mxu0 0.0
    %196 = vmatprep.subr.mxu0 0.0
    %197 = vmatpush1.msra.mxu0 0.0
    %198 = vmatprep.subr.mxu0 0.0
    %199 = vmatpush1.msra.mxu0 0.0
    %200 = vmatprep.subr.mxu0 0.0
    %201 = vmatpush1.msra.mxu0 0.0
    %202 = vmatprep.subr.mxu0 0.0
    %203 = vmatpush1.msra.mxu0 0.0
    %204 = vmatprep.subr.mxu0 0.0
    %205 = vmatpush1.msra.mxu0 0.0
    %206 = vmatprep.subr.mxu0 0.0
    %207 = vmatpush1.msra.mxu0 0.0
    %208 = vmatprep.subr.mxu0 0.0
    %209 = vmatpush1.msra.mxu0 0.0
    %210 = vmatprep.mubr.f32.mxu0 0.0
    %211 = vmatmul.mubr.f32.gmra.mrb[0].mxu0 %v144
    %v212 = vpop.f32.mrb[0].mxu0
    %v213 = vadd.f32 0.0, %v212
    %v214 = vpop.f32.mrb[0].mxu0
    %v215 = vadd.f32 0.0, %v214
    %216 = vdwg.mxu0
    %v217 = vld [vmem:[%s3] sm:$0xff]
    %v218 = vadd.f32 %v213, %v217
    %v219 = vtanh.pop %v218
    %v220 = vmul.f32 %v219, 0.5
    %v221 = vadd.f32 %v220, 0.5
    %v222 = vmul.f32 %v221, 0.0
    %224 = vrot.lane.b32.xlu0 %v219, 32
    %v225 = vpop.permute.xlu0 %224
    %v227 = vmul.f32 %v221, %v225
    %229 = vrot.lane.b32.xlu0 %v227, 32
    %v230 = vpop.permute.xlu0 %229
    %v232 = vadd.f32 %v222, %v230
    %v233 = vtanh.pop %v232
    %235 = vrot.lane.b32.xlu0 %v233, 32
    %v236 = vpop.permute.xlu0 %235
    %v238 = vmul.f32 %v221, %v236
    %v239 = vld [vmem:[#allocation5] sm:$0xff]
    %241 = vrot.lane.b32.xlu0 %v238, 64
    %v242 = vpop.permute.xlu0 %241
    %v244 = vmul.f32 %v239, %v242
    %v245 = vadd.f32 %v244, 0.0
    %s246 = scalar_lea.vmem [#allocation2], 8
    %v247 = vld [vmem:[%s246] sm:$0xff]
    %v248 = vadd.f32 %v247, %v215
    %v249 = vtanh.pop %v248
    %v250 = vmul.f32 %v249, 0.5
    %v251 = vadd.f32 %v250, 0.5
    %v252 = vmul.f32 %v251, %v113
    %254 = vrot.lane.b32.xlu0 %v249, 32
    %v255 = vpop.permute.xlu0 %254
    %v257 = vmul.f32 %v251, %v255
    %259 = vrot.lane.b32.xlu0 %v257, 32
    %v260 = vpop.permute.xlu0 %259
    %v262 = vadd.f32 %v252, %v260
    %v263 = vtanh.pop %v262
    %265 = vrot.lane.b32.xlu0 %v263, 32
    %v266 = vpop.permute.xlu0 %265
    %v268 = vmul.f32 %v251, %v266
    %270 = vrot.lane.b32.xlu0 %v268, 64
    %v271 = vpop.permute.xlu0 %270
    %273 = vrot.lane.b32.xlu0 %v238, 96
    %v274 = vpop.permute.xlu0 %273
    %v276 = vsel %vm124, %v271, %v274
    %v278 = vsel %vm142, %v276, 0
    %280 = vmatprep.subr.mxu0 %v127
    %281 = vmatpush1.msra.mxu0 %v126
    %282 = vmatprep.subr.mxu0 %v129
    %283 = vmatpush1.msra.mxu0 %v128
    %284 = vmatprep.subr.mxu0 %v131
    %285 = vmatpush1.msra.mxu0 %v130
    %286 = vmatprep.subr.mxu0 %v133
    %287 = vmatpush1.msra.mxu0 %v132
    %288 = vmatprep.subr.mxu0 %v135
    %289 = vmatpush1.msra.mxu0 %v134
    %290 = vmatprep.subr.mxu0 %v137
    %291 = vmatpush1.msra.mxu0 %v136
    %292 = vmatprep.subr.mxu0 %v139
    %293 = vmatpush1.msra.mxu0 %v138
    %294 = vmatprep.subr.mxu0 %v141
    %295 = vmatpush1.msra.mxu0 %v140
    %296 = vmatprep.subr.mxu0 0.0
    %297 = vmatpush1.msra.mxu0 0.0
    %298 = vmatprep.subr.mxu0 0.0
    %299 = vmatpush1.msra.mxu0 0.0
    %300 = vmatprep.subr.mxu0 0.0
    %301 = vmatpush1.msra.mxu0 0.0
    %302 = vmatprep.subr.mxu0 0.0
    %303 = vmatpush1.msra.mxu0 0.0
    %304 = vmatprep.subr.mxu0 0.0
    %305 = vmatpush1.msra.mxu0 0.0
    %306 = vmatprep.subr.mxu0 0.0
    %307 = vmatpush1.msra.mxu0 0.0
    %308 = vmatprep.subr.mxu0 0.0
    %309 = vmatpush1.msra.mxu0 0.0
    %310 = vmatprep.subr.mxu0 0.0
    %311 = vmatpush1.msra.mxu0 0.0
    %312 = vmatprep.subr.mxu0 0.0
    %313 = vmatpush1.msra.mxu0 0.0
    %314 = vmatprep.subr.mxu0 0.0
    %315 = vmatpush1.msra.mxu0 0.0
    %316 = vmatprep.subr.mxu0 0.0
    %317 = vmatpush1.msra.mxu0 0.0
    %318 = vmatprep.subr.mxu0 0.0
    %319 = vmatpush1.msra.mxu0 0.0
    %320 = vmatprep.subr.mxu0 0.0
    %321 = vmatpush1.msra.mxu0 0.0
    %322 = vmatprep.subr.mxu0 0.0
    %323 = vmatpush1.msra.mxu0 0.0
    %324 = vmatprep.subr.mxu0 0.0
    %325 = vmatpush1.msra.mxu0 0.0
    %326 = vmatprep.subr.mxu0 0.0
    %327 = vmatpush1.msra.mxu0 0.0
    %328 = vmatprep.subr.mxu0 0.0
    %329 = vmatpush1.msra.mxu0 0.0
    %330 = vmatprep.subr.mxu0 0.0
    %331 = vmatpush1.msra.mxu0 0.0
    %332 = vmatprep.subr.mxu0 0.0
    %333 = vmatpush1.msra.mxu0 0.0
    %334 = vmatprep.subr.mxu0 0.0
    %335 = vmatpush1.msra.mxu0 0.0
    %336 = vmatprep.subr.mxu0 0.0
    %337 = vmatpush1.msra.mxu0 0.0
    %338 = vmatprep.subr.mxu0 0.0
    %339 = vmatpush1.msra.mxu0 0.0
    %340 = vmatprep.subr.mxu0 0.0
    %341 = vmatpush1.msra.mxu0 0.0
    %342 = vmatprep.subr.mxu0 0.0
    %343 = vmatpush1.msra.mxu0 0.0
    %344 = vmatprep.mubr.f32.mxu0 0.0
    %345 = vmatmul.mubr.f32.gmra.mrb[0].mxu0 %v278
    %v346 = vpop.f32.mrb[0].mxu0
    %v347 = vadd.f32 0.0, %v346
    %v348 = vpop.f32.mrb[0].mxu0
    %v349 = vadd.f32 0.0, %v348
    %350 = vdwg.mxu0
    %v351 = vadd.f32 %v347, %v217
    %v352 = vtanh.pop %v351
    %v353 = vmul.f32 %v352, 0.5
    %v354 = vadd.f32 %v353, 0.5
    %v355 = vmul.f32 %v354, %v232
    %357 = vrot.lane.b32.xlu0 %v352, 32
    %v358 = vpop.permute.xlu0 %357
    %v360 = vmul.f32 %v354, %v358
    %362 = vrot.lane.b32.xlu0 %v360, 32
    %v363 = vpop.permute.xlu0 %362
    %v365 = vadd.f32 %v355, %v363
    %v366 = vtanh.pop %v365
    %368 = vrot.lane.b32.xlu0 %v366, 32
    %v369 = vpop.permute.xlu0 %368
    %v371 = vmul.f32 %v354, %v369
    %s372 = scalar_lea.vmem [#allocation5], 8
    %v373 = vld [vmem:[%s372] sm:$0xff]
    %375 = vrot.lane.b32.xlu0 %v371, 64
    %v376 = vpop.permute.xlu0 %375
    %v378 = vmul.f32 %v373, %v376
    %v379 = vadd.f32 %v245, %v378
    %s380 = scalar_lea.vmem [#allocation2], 16
    %v381 = vld [vmem:[%s380] sm:$0xff]
    %v382 = vadd.f32 %v381, %v349
    %v383 = vtanh.pop %v382
    %v384 = vmul.f32 %v383, 0.5
    %v385 = vadd.f32 %v384, 0.5
    %v386 = vmul.f32 %v385, %v262
    %388 = vrot.lane.b32.xlu0 %v383, 32
    %v389 = vpop.permute.xlu0 %388
    %v391 = vmul.f32 %v385, %v389
    %393 = vrot.lane.b32.xlu0 %v391, 32
    %v394 = vpop.permute.xlu0 %393
    %v396 = vadd.f32 %v386, %v394
    %v397 = vtanh.pop %v396
    %399 = vrot.lane.b32.xlu0 %v397, 32
    %v400 = vpop.permute.xlu0 %399
    %v402 = vmul.f32 %v385, %v400
    %404 = vrot.lane.b32.xlu0 %v402, 64
    %v405 = vpop.permute.xlu0 %404
    %407 = vrot.lane.b32.xlu0 %v371, 96
    %v408 = vpop.permute.xlu0 %407
    %v410 = vsel %vm124, %v405, %v408
    %v412 = vsel %vm142, %v410, 0
    %414 = vmatprep.subr.mxu0 %v127
    %415 = vmatpush1.msra.mxu0 %v126
    %416 = vmatprep.subr.mxu0 %v129
    %417 = vmatpush1.msra.mxu0 %v128
    %418 = vmatprep.subr.mxu0 %v131
    %419 = vmatpush1.msra.mxu0 %v130
    %420 = vmatprep.subr.mxu0 %v133
    %421 = vmatpush1.msra.mxu0 %v132
    %422 = vmatprep.subr.mxu0 %v135
    %423 = vmatpush1.msra.mxu0 %v134
    %424 = vmatprep.subr.mxu0 %v137
    %425 = vmatpush1.msra.mxu0 %v136
    %426 = vmatprep.subr.mxu0 %v139
    %427 = vmatpush1.msra.mxu0 %v138
    %428 = vmatprep.subr.mxu0 %v141
    %429 = vmatpush1.msra.mxu0 %v140
    %430 = vmatprep.subr.mxu0 0.0
    %431 = vmatpush1.msra.mxu0 0.0
    %432 = vmatprep.subr.mxu0 0.0
    %433 = vmatpush1.msra.mxu0 0.0
    %434 = vmatprep.subr.mxu0 0.0
    %435 = vmatpush1.msra.mxu0 0.0
    %436 = vmatprep.subr.mxu0 0.0
    %437 = vmatpush1.msra.mxu0 0.0
    %438 = vmatprep.subr.mxu0 0.0
    %439 = vmatpush1.msra.mxu0 0.0
    %440 = vmatprep.subr.mxu0 0.0
    %441 = vmatpush1.msra.mxu0 0.0
    %442 = vmatprep.subr.mxu0 0.0
    %443 = vmatpush1.msra.mxu0 0.0
    %444 = vmatprep.subr.mxu0 0.0
    %445 = vmatpush1.msra.mxu0 0.0
    %446 = vmatprep.subr.mxu0 0.0
    %447 = vmatpush1.msra.mxu0 0.0
    %448 = vmatprep.subr.mxu0 0.0
    %449 = vmatpush1.msra.mxu0 0.0
    %450 = vmatprep.subr.mxu0 0.0
    %451 = vmatpush1.msra.mxu0 0.0
    %452 = vmatprep.subr.mxu0 0.0
    %453 = vmatpush1.msra.mxu0 0.0
    %454 = vmatprep.subr.mxu0 0.0
    %455 = vmatpush1.msra.mxu0 0.0
    %456 = vmatprep.subr.mxu0 0.0
    %457 = vmatpush1.msra.mxu0 0.0
    %458 = vmatprep.subr.mxu0 0.0
    %459 = vmatpush1.msra.mxu0 0.0
    %460 = vmatprep.subr.mxu0 0.0
    %461 = vmatpush1.msra.mxu0 0.0
    %462 = vmatprep.subr.mxu0 0.0
    %463 = vmatpush1.msra.mxu0 0.0
    %464 = vmatprep.subr.mxu0 0.0
    %465 = vmatpush1.msra.mxu0 0.0
    %466 = vmatprep.subr.mxu0 0.0
    %467 = vmatpush1.msra.mxu0 0.0
    %468 = vmatprep.subr.mxu0 0.0
    %469 = vmatpush1.msra.mxu0 0.0
    %470 = vmatprep.subr.mxu0 0.0
    %471 = vmatpush1.msra.mxu0 0.0
    %472 = vmatprep.subr.mxu0 0.0
    %473 = vmatpush1.msra.mxu0 0.0
    %474 = vmatprep.subr.mxu0 0.0
    %475 = vmatpush1.msra.mxu0 0.0
    %476 = vmatprep.subr.mxu0 0.0
    %477 = vmatpush1.msra.mxu0 0.0
    %478 = vmatprep.mubr.f32.mxu0 0.0
    %479 = vmatmul.mubr.f32.gmra.mrb[0].mxu0 %v412
    %v480 = vpop.f32.mrb[0].mxu0
    %v481 = vadd.f32 0.0, %v480
    %v482 = vpop.f32.mrb[0].mxu0
    %v483 = vadd.f32 0.0, %v482
    %484 = vdwg.mxu0
    %v485 = vadd.f32 %v481, %v217
    %v486 = vtanh.pop %v485
    %v487 = vmul.f32 %v486, 0.5
    %v488 = vadd.f32 %v487, 0.5
    %v489 = vmul.f32 %v488, %v365
    %491 = vrot.lane.b32.xlu0 %v486, 32
    %v492 = vpop.permute.xlu0 %491
    %v494 = vmul.f32 %v488, %v492
    %496 = vrot.lane.b32.xlu0 %v494, 32
    %v497 = vpop.permute.xlu0 %496
    %v499 = vadd.f32 %v489, %v497
    %v500 = vtanh.pop %v499
    %502 = vrot.lane.b32.xlu0 %v500, 32
    %v503 = vpop.permute.xlu0 %502
    %v505 = vmul.f32 %v488, %v503
    %s506 = scalar_lea.vmem [#allocation5], 16
    %v507 = vld [vmem:[%s506] sm:$0xff]
    %509 = vrot.lane.b32.xlu0 %v505, 64
    %v510 = vpop.permute.xlu0 %509
    %v512 = vmul.f32 %v507, %v510
    %v513 = vadd.f32 %v379, %v512
    %s514 = scalar_lea.vmem [#allocation2], 24
    %v515 = vld [vmem:[%s514] sm:$0xff]
    %v516 = vadd.f32 %v515, %v483
    %v517 = vtanh.pop %v516
    %v518 = vmul.f32 %v517, 0.5
    %v519 = vadd.f32 %v518, 0.5
    %v520 = vmul.f32 %v519, %v396
    %522 = vrot.lane.b32.xlu0 %v517, 32
    %v523 = vpop.permute.xlu0 %522
    %v525 = vmul.f32 %v519, %v523
    %527 = vrot.lane.b32.xlu0 %v525, 32
    %v528 = vpop.permute.xlu0 %527
    %v530 = vadd.f32 %v520, %v528
    %v531 = vtanh.pop %v530
    %533 = vrot.lane.b32.xlu0 %v531, 32
    %v534 = vpop.permute.xlu0 %533
    %v536 = vmul.f32 %v519, %v534
    %538 = vrot.lane.b32.xlu0 %v536, 64
    %v539 = vpop.permute.xlu0 %538
    %541 = vrot.lane.b32.xlu0 %v505, 96
    %v542 = vpop.permute.xlu0 %541
    %v544 = vsel %vm124, %v539, %v542
    %v546 = vsel %vm142, %v544, 0
    %548 = vmatprep.subr.mxu0 %v127
    %549 = vmatpush1.msra.mxu0 %v126
    %550 = vmatprep.subr.mxu0 %v129
    %551 = vmatpush1.msra.mxu0 %v128
    %552 = vmatprep.subr.mxu0 %v131
    %553 = vmatpush1.msra.mxu0 %v130
    %554 = vmatprep.subr.mxu0 %v133
    %555 = vmatpush1.msra.mxu0 %v132
    %556 = vmatprep.subr.mxu0 %v135
    %557 = vmatpush1.msra.mxu0 %v134
    %558 = vmatprep.subr.mxu0 %v137
    %559 = vmatpush1.msra.mxu0 %v136
    %560 = vmatprep.subr.mxu0 %v139
    %561 = vmatpush1.msra.mxu0 %v138
    %562 = vmatprep.subr.mxu0 %v141
    %563 = vmatpush1.msra.mxu0 %v140
    %564 = vmatprep.subr.mxu0 0.0
    %565 = vmatpush1.msra.mxu0 0.0
    %566 = vmatprep.subr.mxu0 0.0
    %567 = vmatpush1.msra.mxu0 0.0
    %568 = vmatprep.subr.mxu0 0.0
    %569 = vmatpush1.msra.mxu0 0.0
    %570 = vmatprep.subr.mxu0 0.0
    %571 = vmatpush1.msra.mxu0 0.0
    %572 = vmatprep.subr.mxu0 0.0
    %573 = vmatpush1.msra.mxu0 0.0
    %574 = vmatprep.subr.mxu0 0.0
    %575 = vmatpush1.msra.mxu0 0.0
    %576 = vmatprep.subr.mxu0 0.0
    %577 = vmatpush1.msra.mxu0 0.0
    %578 = vmatprep.subr.mxu0 0.0
    %579 = vmatpush1.msra.mxu0 0.0
    %580 = vmatprep.subr.mxu0 0.0
    %581 = vmatpush1.msra.mxu0 0.0
    %582 = vmatprep.subr.mxu0 0.0
    %583 = vmatpush1.msra.mxu0 0.0
    %584 = vmatprep.subr.mxu0 0.0
    %585 = vmatpush1.msra.mxu0 0.0
    %586 = vmatprep.subr.mxu0 0.0
    %587 = vmatpush1.msra.mxu0 0.0
    %588 = vmatprep.subr.mxu0 0.0
    %589 = vmatpush1.msra.mxu0 0.0
    %590 = vmatprep.subr.mxu0 0.0
    %591 = vmatpush1.msra.mxu0 0.0
    %592 = vmatprep.subr.mxu0 0.0
    %593 = vmatpush1.msra.mxu0 0.0
    %594 = vmatprep.subr.mxu0 0.0
    %595 = vmatpush1.msra.mxu0 0.0
    %596 = vmatprep.subr.mxu0 0.0
    %597 = vmatpush1.msra.mxu0 0.0
    %598 = vmatprep.subr.mxu0 0.0
    %599 = vmatpush1.msra.mxu0 0.0
    %600 = vmatprep.subr.mxu0 0.0
    %601 = vmatpush1.msra.mxu0 0.0
    %602 = vmatprep.subr.mxu0 0.0
    %603 = vmatpush1.msra.mxu0 0.0
    %604 = vmatprep.subr.mxu0 0.0
    %605 = vmatpush1.msra.mxu0 0.0
    %606 = vmatprep.subr.mxu0 0.0
    %607 = vmatpush1.msra.mxu0 0.0
    %608 = vmatprep.subr.mxu0 0.0
    %609 = vmatpush1.msra.mxu0 0.0
    %610 = vmatprep.subr.mxu0 0.0
    %611 = vmatpush1.msra.mxu0 0.0
    %612 = vmatprep.mubr.f32.mxu0 0.0
    %613 = vmatmul.mubr.f32.gmra.mrb[0].mxu0 %v546
    %v614 = vpop.f32.mrb[0].mxu0
    %v615 = vadd.f32 0.0, %v614
    %v616 = vpop.f32.mrb[0].mxu0
    %v617 = vadd.f32 0.0, %v616
    %618 = vdwg.mxu0
    %v619 = vadd.f32 %v615, %v217
    %v620 = vtanh.pop %v619
    %v621 = vmul.f32 %v620, 0.5
    %v622 = vadd.f32 %v621, 0.5
    %v623 = vmul.f32 %v622, %v499
    %625 = vrot.lane.b32.xlu0 %v620, 32
    %v626 = vpop.permute.xlu0 %625
    %v628 = vmul.f32 %v622, %v626
    %630 = vrot.lane.b32.xlu0 %v628, 32
    %v631 = vpop.permute.xlu0 %630
    %v633 = vadd.f32 %v623, %v631
    %v634 = vtanh.pop %v633
    %636 = vrot.lane.b32.xlu0 %v634, 32
    %v637 = vpop.permute.xlu0 %636
    %v639 = vmul.f32 %v622, %v637
    %s640 = scalar_lea.vmem [#allocation5], 24
    %v641 = vld [vmem:[%s640] sm:$0xff]
    %643 = vrot.lane.b32.xlu0 %v639, 64
    %v644 = vpop.permute.xlu0 %643
    %v646 = vmul.f32 %v641, %v644
    %v647 = vadd.f32 %v513, %v646
    %s648 = scalar_lea.vmem [#allocation2], 32
    %v649 = vld [vmem:[%s648] sm:$0xff]
    %v650 = vadd.f32 %v649, %v617
    %v651 = vtanh.pop %v650
    %v652 = vmul.f32 %v651, 0.5
    %v653 = vadd.f32 %v652, 0.5
    %v654 = vmul.f32 %v653, %v530
    %656 = vrot.lane.b32.xlu0 %v651, 32
    %v657 = vpop.permute.xlu0 %656
    %v659 = vmul.f32 %v653, %v657
    %661 = vrot.lane.b32.xlu0 %v659, 32
    %v662 = vpop.permute.xlu0 %661
    %v664 = vadd.f32 %v654, %v662
    %v665 = vtanh.pop %v664
    %667 = vrot.lane.b32.xlu0 %v665, 32
    %v668 = vpop.permute.xlu0 %667
    %v670 = vmul.f32 %v653, %v668
    %672 = vrot.lane.b32.xlu0 %v670, 64
    %v673 = vpop.permute.xlu0 %672
    %675 = vrot.lane.b32.xlu0 %v639, 96
    %v676 = vpop.permute.xlu0 %675
    %v678 = vsel %vm124, %v673, %v676
    %v680 = vsel %vm142, %v678, 0
    %682 = vmatprep.subr.mxu0 %v127
    %683 = vmatpush1.msra.mxu0 %v126
    %684 = vmatprep.subr.mxu0 %v129
    %685 = vmatpush1.msra.mxu0 %v128
    %686 = vmatprep.subr.mxu0 %v131
    %687 = vmatpush1.msra.mxu0 %v130
    %688 = vmatprep.subr.mxu0 %v133
    %689 = vmatpush1.msra.mxu0 %v132
    %690 = vmatprep.subr.mxu0 %v135
    %691 = vmatpush1.msra.mxu0 %v134
    %692 = vmatprep.subr.mxu0 %v137
    %693 = vmatpush1.msra.mxu0 %v136
    %694 = vmatprep.subr.mxu0 %v139
    %695 = vmatpush1.msra.mxu0 %v138
    %696 = vmatprep.subr.mxu0 %v141
    %697 = vmatpush1.msra.mxu0 %v140
    %698 = vmatprep.subr.mxu0 0.0
    %699 = vmatpush1.msra.mxu0 0.0
    %700 = vmatprep.subr.mxu0 0.0
    %701 = vmatpush1.msra.mxu0 0.0
    %702 = vmatprep.subr.mxu0 0.0
    %703 = vmatpush1.msra.mxu0 0.0
    %704 = vmatprep.subr.mxu0 0.0
    %705 = vmatpush1.msra.mxu0 0.0
    %706 = vmatprep.subr.mxu0 0.0
    %707 = vmatpush1.msra.mxu0 0.0
    %708 = vmatprep.subr.mxu0 0.0
    %709 = vmatpush1.msra.mxu0 0.0
    %710 = vmatprep.subr.mxu0 0.0
    %711 = vmatpush1.msra.mxu0 0.0
    %712 = vmatprep.subr.mxu0 0.0
    %713 = vmatpush1.msra.mxu0 0.0
    %714 = vmatprep.subr.mxu0 0.0
    %715 = vmatpush1.msra.mxu0 0.0
    %716 = vmatprep.subr.mxu0 0.0
    %717 = vmatpush1.msra.mxu0 0.0
    %718 = vmatprep.subr.mxu0 0.0
    %719 = vmatpush1.msra.mxu0 0.0
    %720 = vmatprep.subr.mxu0 0.0
    %721 = vmatpush1.msra.mxu0 0.0
    %722 = vmatprep.subr.mxu0 0.0
    %723 = vmatpush1.msra.mxu0 0.0
    %724 = vmatprep.subr.mxu0 0.0
    %725 = vmatpush1.msra.mxu0 0.0
    %726 = vmatprep.subr.mxu0 0.0
    %727 = vmatpush1.msra.mxu0 0.0
    %728 = vmatprep.subr.mxu0 0.0
    %729 = vmatpush1.msra.mxu0 0.0
    %730 = vmatprep.subr.mxu0 0.0
    %731 = vmatpush1.msra.mxu0 0.0
    %732 = vmatprep.subr.mxu0 0.0
    %733 = vmatpush1.msra.mxu0 0.0
    %734 = vmatprep.subr.mxu0 0.0
    %735 = vmatpush1.msra.mxu0 0.0
    %736 = vmatprep.subr.mxu0 0.0
    %737 = vmatpush1.msra.mxu0 0.0
    %738 = vmatprep.subr.mxu0 0.0
    %739 = vmatpush1.msra.mxu0 0.0
    %740 = vmatprep.subr.mxu0 0.0
    %741 = vmatpush1.msra.mxu0 0.0
    %742 = vmatprep.subr.mxu0 0.0
    %743 = vmatpush1.msra.mxu0 0.0
    %744 = vmatprep.subr.mxu0 0.0
    %745 = vmatpush1.msra.mxu0 0.0
    %746 = vmatprep.mubr.f32.mxu0 0.0
    %747 = vmatmul.mubr.f32.gmra.mrb[0].mxu0 %v680
    %v748 = vpop.f32.mrb[0].mxu0
    %v749 = vadd.f32 0.0, %v748
    %v750 = vpop.f32.mrb[0].mxu0
    %v751 = vadd.f32 0.0, %v750
    %752 = vdwg.mxu0
    %v753 = vadd.f32 %v749, %v217
    %v754 = vtanh.pop %v753
    %v755 = vmul.f32 %v754, 0.5
    %v756 = vadd.f32 %v755, 0.5
    %v757 = vmul.f32 %v756, %v633
    %759 = vrot.lane.b32.xlu0 %v754, 32
    %v760 = vpop.permute.xlu0 %759
    %v762 = vmul.f32 %v756, %v760
    %764 = vrot.lane.b32.xlu0 %v762, 32
    %v765 = vpop.permute.xlu0 %764
    %v767 = vadd.f32 %v757, %v765
    %v768 = vtanh.pop %v767
    %770 = vrot.lane.b32.xlu0 %v768, 32
    %v771 = vpop.permute.xlu0 %770
    %v773 = vmul.f32 %v756, %v771
    %s774 = scalar_lea.vmem [#allocation5], 32
    %v775 = vld [vmem:[%s774] sm:$0xff]
    %777 = vrot.lane.b32.xlu0 %v773, 64
    %v778 = vpop.permute.xlu0 %777
    %v780 = vmul.f32 %v775, %v778
    %v781 = vadd.f32 %v647, %v780
    %s782 = scalar_lea.vmem [#allocation2], 40
    %v783 = vld [vmem:[%s782] sm:$0xff]
    %v784 = vadd.f32 %v783, %v751
    %v785 = vtanh.pop %v784
    %v786 = vmul.f32 %v785, 0.5
    %v787 = vadd.f32 %v786, 0.5
    %v788 = vmul.f32 %v787, %v664
    %790 = vrot.lane.b32.xlu0 %v785, 32
    %v791 = vpop.permute.xlu0 %790
    %v793 = vmul.f32 %v787, %v791
    %795 = vrot.lane.b32.xlu0 %v793, 32
    %v796 = vpop.permute.xlu0 %795
    %v798 = vadd.f32 %v788, %v796
    %v799 = vtanh.pop %v798
    %801 = vrot.lane.b32.xlu0 %v799, 32
    %v802 = vpop.permute.xlu0 %801
    %v804 = vmul.f32 %v787, %v802
    %806 = vrot.lane.b32.xlu0 %v804, 64
    %v807 = vpop.permute.xlu0 %806
    %809 = vrot.lane.b32.xlu0 %v773, 96
    %v810 = vpop.permute.xlu0 %809
    %v812 = vsel %vm124, %v807, %v810
    %v814 = vsel %vm142, %v812, 0
    %816 = vmatprep.subr.mxu0 %v127
    %817 = vmatpush1.msra.mxu0 %v126
    %818 = vmatprep.subr.mxu0 %v129
    %819 = vmatpush1.msra.mxu0 %v128
    %820 = vmatprep.subr.mxu0 %v131
    %821 = vmatpush1.msra.mxu0 %v130
    %822 = vmatprep.subr.mxu0 %v133
    %823 = vmatpush1.msra.mxu0 %v132
    %824 = vmatprep.subr.mxu0 %v135
    %825 = vmatpush1.msra.mxu0 %v134
    %826 = vmatprep.subr.mxu0 %v137
    %827 = vmatpush1.msra.mxu0 %v136
    %828 = vmatprep.subr.mxu0 %v139
    %829 = vmatpush1.msra.mxu0 %v138
    %830 = vmatprep.subr.mxu0 %v141
    %831 = vmatpush1.msra.mxu0 %v140
    %832 = vmatprep.subr.mxu0 0.0
    %833 = vmatpush1.msra.mxu0 0.0
    %834 = vmatprep.subr.mxu0 0.0
    %835 = vmatpush1.msra.mxu0 0.0
    %836 = vmatprep.subr.mxu0 0.0
    %837 = vmatpush1.msra.mxu0 0.0
    %838 = vmatprep.subr.mxu0 0.0
    %839 = vmatpush1.msra.mxu0 0.0
    %840 = vmatprep.subr.mxu0 0.0
    %841 = vmatpush1.msra.mxu0 0.0
    %842 = vmatprep.subr.mxu0 0.0
    %843 = vmatpush1.msra.mxu0 0.0
    %844 = vmatprep.subr.mxu0 0.0
    %845 = vmatpush1.msra.mxu0 0.0
    %846 = vmatprep.subr.mxu0 0.0
    %847 = vmatpush1.msra.mxu0 0.0
    %848 = vmatprep.subr.mxu0 0.0
    %849 = vmatpush1.msra.mxu0 0.0
    %850 = vmatprep.subr.mxu0 0.0
    %851 = vmatpush1.msra.mxu0 0.0
    %852 = vmatprep.subr.mxu0 0.0
    %853 = vmatpush1.msra.mxu0 0.0
    %854 = vmatprep.subr.mxu0 0.0
    %855 = vmatpush1.msra.mxu0 0.0
    %856 = vmatprep.subr.mxu0 0.0
    %857 = vmatpush1.msra.mxu0 0.0
    %858 = vmatprep.subr.mxu0 0.0
    %859 = vmatpush1.msra.mxu0 0.0
    %860 = vmatprep.subr.mxu0 0.0
    %861 = vmatpush1.msra.mxu0 0.0
    %862 = vmatprep.subr.mxu0 0.0
    %863 = vmatpush1.msra.mxu0 0.0
    %864 = vmatprep.subr.mxu0 0.0
    %865 = vmatpush1.msra.mxu0 0.0
    %866 = vmatprep.subr.mxu0 0.0
    %867 = vmatpush1.msra.mxu0 0.0
    %868 = vmatprep.subr.mxu0 0.0
    %869 = vmatpush1.msra.mxu0 0.0
    %870 = vmatprep.subr.mxu0 0.0
    %871 = vmatpush1.msra.mxu0 0.0
    %872 = vmatprep.subr.mxu0 0.0
    %873 = vmatpush1.msra.mxu0 0.0
    %874 = vmatprep.subr.mxu0 0.0
    %875 = vmatpush1.msra.mxu0 0.0
    %876 = vmatprep.subr.mxu0 0.0
    %877 = vmatpush1.msra.mxu0 0.0
    %878 = vmatprep.subr.mxu0 0.0
    %879 = vmatpush1.msra.mxu0 0.0
    %880 = vmatprep.mubr.f32.mxu0 0.0
    %881 = vmatmul.mubr.f32.gmra.mrb[0].mxu0 %v814
    %v882 = vpop.f32.mrb[0].mxu0
    %v883 = vadd.f32 0.0, %v882
    %v884 = vpop.f32.mrb[0].mxu0
    %v885 = vadd.f32 0.0, %v884
    %886 = vdwg.mxu0
    %v887 = vadd.f32 %v883, %v217
    %v888 = vtanh.pop %v887
    %v889 = vmul.f32 %v888, 0.5
    %v890 = vadd.f32 %v889, 0.5
    %v891 = vmul.f32 %v890, %v767
    %893 = vrot.lane.b32.xlu0 %v888, 32
    %v894 = vpop.permute.xlu0 %893
    %v896 = vmul.f32 %v890, %v894
    %898 = vrot.lane.b32.xlu0 %v896, 32
    %v899 = vpop.permute.xlu0 %898
    %v901 = vadd.f32 %v891, %v899
    %v902 = vtanh.pop %v901
    %904 = vrot.lane.b32.xlu0 %v902, 32
    %v905 = vpop.permute.xlu0 %904
    %v907 = vmul.f32 %v890, %v905
    %s908 = scalar_lea.vmem [#allocation5], 40
    %v909 = vld [vmem:[%s908] sm:$0xff]
    %911 = vrot.lane.b32.xlu0 %v907, 64
    %v912 = vpop.permute.xlu0 %911
    %v914 = vmul.f32 %v909, %v912
    %v915 = vadd.f32 %v781, %v914
    %s916 = scalar_lea.vmem [#allocation2], 48
    %v917 = vld [vmem:[%s916] sm:$0xff]
    %v918 = vadd.f32 %v917, %v885
    %v919 = vtanh.pop %v918
    %v920 = vmul.f32 %v919, 0.5
    %v921 = vadd.f32 %v920, 0.5
    %v922 = vmul.f32 %v921, %v798
    %924 = vrot.lane.b32.xlu0 %v919, 32
    %v925 = vpop.permute.xlu0 %924
    %v927 = vmul.f32 %v921, %v925
    %929 = vrot.lane.b32.xlu0 %v927, 32
    %v930 = vpop.permute.xlu0 %929
    %v932 = vadd.f32 %v922, %v930
    %v933 = vtanh.pop %v932
    %935 = vrot.lane.b32.xlu0 %v933, 32
    %v936 = vpop.permute.xlu0 %935
    %v938 = vmul.f32 %v921, %v936
    %940 = vrot.lane.b32.xlu0 %v938, 64
    %v941 = vpop.permute.xlu0 %940
    %943 = vrot.lane.b32.xlu0 %v907, 96
    %v944 = vpop.permute.xlu0 %943
    %v946 = vsel %vm124, %v941, %v944
    %v948 = vsel %vm142, %v946, 0
    %950 = vmatprep.subr.mxu0 %v127
    %951 = vmatpush1.msra.mxu0 %v126
    %952 = vmatprep.subr.mxu0 %v129
    %953 = vmatpush1.msra.mxu0 %v128
    %954 = vmatprep.subr.mxu0 %v131
    %955 = vmatpush1.msra.mxu0 %v130
    %956 = vmatprep.subr.mxu0 %v133
    %957 = vmatpush1.msra.mxu0 %v132
    %958 = vmatprep.subr.mxu0 %v135
    %959 = vmatpush1.msra.mxu0 %v134
    %960 = vmatprep.subr.mxu0 %v137
    %961 = vmatpush1.msra.mxu0 %v136
    %962 = vmatprep.subr.mxu0 %v139
    %963 = vmatpush1.msra.mxu0 %v138
    %964 = vmatprep.subr.mxu0 %v141
    %965 = vmatpush1.msra.mxu0 %v140
    %966 = vmatprep.subr.mxu0 0.0
    %967 = vmatpush1.msra.mxu0 0.0
    %968 = vmatprep.subr.mxu0 0.0
    %969 = vmatpush1.msra.mxu0 0.0
    %970 = vmatprep.subr.mxu0 0.0
    %971 = vmatpush1.msra.mxu0 0.0
    %972 = vmatprep.subr.mxu0 0.0
    %973 = vmatpush1.msra.mxu0 0.0
    %974 = vmatprep.subr.mxu0 0.0
    %975 = vmatpush1.msra.mxu0 0.0
    %976 = vmatprep.subr.mxu0 0.0
    %977 = vmatpush1.msra.mxu0 0.0
    %978 = vmatprep.subr.mxu0 0.0
    %979 = vmatpush1.msra.mxu0 0.0
    %980 = vmatprep.subr.mxu0 0.0
    %981 = vmatpush1.msra.mxu0 0.0
    %982 = vmatprep.subr.mxu0 0.0
    %983 = vmatpush1.msra.mxu0 0.0
    %984 = vmatprep.subr.mxu0 0.0
    %985 = vmatpush1.msra.mxu0 0.0
    %986 = vmatprep.subr.mxu0 0.0
    %987 = vmatpush1.msra.mxu0 0.0
    %988 = vmatprep.subr.mxu0 0.0
    %989 = vmatpush1.msra.mxu0 0.0
    %990 = vmatprep.subr.mxu0 0.0
    %991 = vmatpush1.msra.mxu0 0.0
    %992 = vmatprep.subr.mxu0 0.0
    %993 = vmatpush1.msra.mxu0 0.0
    %994 = vmatprep.subr.mxu0 0.0
    %995 = vmatpush1.msra.mxu0 0.0
    %996 = vmatprep.subr.mxu0 0.0
    %997 = vmatpush1.msra.mxu0 0.0
    %998 = vmatprep.subr.mxu0 0.0
    %999 = vmatpush1.msra.mxu0 0.0
    %1000 = vmatprep.subr.mxu0 0.0
    %1001 = vmatpush1.msra.mxu0 0.0
    %1002 = vmatprep.subr.mxu0 0.0
    %1003 = vmatpush1.msra.mxu0 0.0
    %1004 = vmatprep.subr.mxu0 0.0
    %1005 = vmatpush1.msra.mxu0 0.0
    %1006 = vmatprep.subr.mxu0 0.0
    %1007 = vmatpush1.msra.mxu0 0.0
    %1008 = vmatprep.subr.mxu0 0.0
    %1009 = vmatpush1.msra.mxu0 0.0
    %1010 = vmatprep.subr.mxu0 0.0
    %1011 = vmatpush1.msra.mxu0 0.0
    %1012 = vmatprep.subr.mxu0 0.0
    %1013 = vmatpush1.msra.mxu0 0.0
    %1014 = vmatprep.mubr.f32.mxu0 0.0
    %1015 = vmatmul.mubr.f32.gmra.mrb[0].mxu0 %v948
    %v1016 = vpop.f32.mrb[0].mxu0
    %v1017 = vadd.f32 0.0, %v1016
    %v1018 = vpop.f32.mrb[0].mxu0
    %v1019 = vadd.f32 0.0, %v1018
    %1020 = vdwg.mxu0
    %v1021 = vadd.f32 %v1017, %v217
    %v1022 = vtanh.pop %v1021
    %v1023 = vmul.f32 %v1022, 0.5
    %v1024 = vadd.f32 %v1023, 0.5
    %v1025 = vmul.f32 %v1024, %v901
    %1027 = vrot.lane.b32.xlu0 %v1022, 32
    %v1028 = vpop.permute.xlu0 %1027
    %v1030 = vmul.f32 %v1024, %v1028
    %1032 = vrot.lane.b32.xlu0 %v1030, 32
    %v1033 = vpop.permute.xlu0 %1032
    %v1035 = vadd.f32 %v1025, %v1033
    %v1036 = vtanh.pop %v1035
    %1038 = vrot.lane.b32.xlu0 %v1036, 32
    %v1039 = vpop.permute.xlu0 %1038
    %v1041 = vmul.f32 %v1024, %v1039
    %s1042 = scalar_lea.vmem [#allocation5], 48
    %v1043 = vld [vmem:[%s1042] sm:$0xff]
    %1045 = vrot.lane.b32.xlu0 %v1041, 64
    %v1046 = vpop.permute.xlu0 %1045
    %v1048 = vmul.f32 %v1043, %v1046
    %v1049 = vadd.f32 %v915, %v1048
    %s1050 = scalar_lea.vmem [#allocation2], 56
    %v1051 = vld [vmem:[%s1050] sm:$0xff]
    %v1052 = vadd.f32 %v1051, %v1019
    %v1053 = vtanh.pop %v1052
    %v1054 = vmul.f32 %v1053, 0.5
    %v1055 = vadd.f32 %v1054, 0.5
    %v1056 = vmul.f32 %v1055, %v932
    %1058 = vrot.lane.b32.xlu0 %v1053, 32
    %v1059 = vpop.permute.xlu0 %1058
    %v1061 = vmul.f32 %v1055, %v1059
    %1063 = vrot.lane.b32.xlu0 %v1061, 32
    %v1064 = vpop.permute.xlu0 %1063
    %v1066 = vadd.f32 %v1056, %v1064
    %v1067 = vtanh.pop %v1066
    %1069 = vrot.lane.b32.xlu0 %v1067, 32
    %v1070 = vpop.permute.xlu0 %1069
    %v1072 = vmul.f32 %v1055, %v1070
    %1074 = vrot.lane.b32.xlu0 %v1072, 64
    %v1075 = vpop.permute.xlu0 %1074
    %1077 = vrot.lane.b32.xlu0 %v1041, 96
    %v1078 = vpop.permute.xlu0 %1077
    %v1080 = vsel %vm124, %v1075, %v1078
    %v1082 = vsel %vm142, %v1080, 0
    %1084 = vmatprep.subr.mxu0 %v127
    %1085 = vmatpush1.msra.mxu0 %v126
    %1086 = vmatprep.subr.mxu0 %v129
    %1087 = vmatpush1.msra.mxu0 %v128
    %1088 = vmatprep.subr.mxu0 %v131
    %1089 = vmatpush1.msra.mxu0 %v130
    %1090 = vmatprep.subr.mxu0 %v133
    %1091 = vmatpush1.msra.mxu0 %v132
    %1092 = vmatprep.subr.mxu0 %v135
    %1093 = vmatpush1.msra.mxu0 %v134
    %1094 = vmatprep.subr.mxu0 %v137
    %1095 = vmatpush1.msra.mxu0 %v136
    %1096 = vmatprep.subr.mxu0 %v139
    %1097 = vmatpush1.msra.mxu0 %v138
    %1098 = vmatprep.subr.mxu0 %v141
    %1099 = vmatpush1.msra.mxu0 %v140
    %1100 = vmatprep.subr.mxu0 0.0
    %1101 = vmatpush1.msra.mxu0 0.0
    %1102 = vmatprep.subr.mxu0 0.0
    %1103 = vmatpush1.msra.mxu0 0.0
    %1104 = vmatprep.subr.mxu0 0.0
    %1105 = vmatpush1.msra.mxu0 0.0
    %1106 = vmatprep.subr.mxu0 0.0
    %1107 = vmatpush1.msra.mxu0 0.0
    %1108 = vmatprep.subr.mxu0 0.0
    %1109 = vmatpush1.msra.mxu0 0.0
    %1110 = vmatprep.subr.mxu0 0.0
    %1111 = vmatpush1.msra.mxu0 0.0
    %1112 = vmatprep.subr.mxu0 0.0
    %1113 = vmatpush1.msra.mxu0 0.0
    %1114 = vmatprep.subr.mxu0 0.0
    %1115 = vmatpush1.msra.mxu0 0.0
    %1116 = vmatprep.subr.mxu0 0.0
    %1117 = vmatpush1.msra.mxu0 0.0
    %1118 = vmatprep.subr.mxu0 0.0
    %1119 = vmatpush1.msra.mxu0 0.0
    %1120 = vmatprep.subr.mxu0 0.0
    %1121 = vmatpush1.msra.mxu0 0.0
    %1122 = vmatprep.subr.mxu0 0.0
    %1123 = vmatpush1.msra.mxu0 0.0
    %1124 = vmatprep.subr.mxu0 0.0
    %1125 = vmatpush1.msra.mxu0 0.0
    %1126 = vmatprep.subr.mxu0 0.0
    %1127 = vmatpush1.msra.mxu0 0.0
    %1128 = vmatprep.subr.mxu0 0.0
    %1129 = vmatpush1.msra.mxu0 0.0
    %1130 = vmatprep.subr.mxu0 0.0
    %1131 = vmatpush1.msra.mxu0 0.0
    %1132 = vmatprep.subr.mxu0 0.0
    %1133 = vmatpush1.msra.mxu0 0.0
    %1134 = vmatprep.subr.mxu0 0.0
    %1135 = vmatpush1.msra.mxu0 0.0
    %1136 = vmatprep.subr.mxu0 0.0
    %1137 = vmatpush1.msra.mxu0 0.0
    %1138 = vmatprep.subr.mxu0 0.0
    %1139 = vmatpush1.msra.mxu0 0.0
    %1140 = vmatprep.subr.mxu0 0.0
    %1141 = vmatpush1.msra.mxu0 0.0
    %1142 = vmatprep.subr.mxu0 0.0
    %1143 = vmatpush1.msra.mxu0 0.0
    %1144 = vmatprep.subr.mxu0 0.0
    %1145 = vmatpush1.msra.mxu0 0.0
    %1146 = vmatprep.subr.mxu0 0.0
    %1147 = vmatpush1.msra.mxu0 0.0
    %1148 = vmatprep.mubr.f32.mxu0 0.0
    %1149 = vmatmul.mubr.f32.gmra.mrb[0].mxu0 %v1082
    %v1150 = vpop.f32.mrb[0].mxu0
    %v1151 = vadd.f32 0.0, %v1150
    %v1152 = vpop.f32.mrb[0].mxu0
    %v1153 = vadd.f32 0.0, %v1152
    %1154 = vdwg.mxu0
    %v1155 = vadd.f32 %v1151, %v217
    %v1156 = vtanh.pop %v1155
    %v1157 = vmul.f32 %v1156, 0.5
    %v1158 = vadd.f32 %v1157, 0.5
    %v1159 = vmul.f32 %v1158, %v1035
    %1161 = vrot.lane.b32.xlu0 %v1156, 32
    %v1162 = vpop.permute.xlu0 %1161
    %v1164 = vmul.f32 %v1158, %v1162
    %1166 = vrot.lane.b32.xlu0 %v1164, 32
    %v1167 = vpop.permute.xlu0 %1166
    %v1169 = vadd.f32 %v1159, %v1167
    %v1170 = vtanh.pop %v1169
    %1172 = vrot.lane.b32.xlu0 %v1170, 32
    %v1173 = vpop.permute.xlu0 %1172
    %v1175 = vmul.f32 %v1158, %v1173
    %s1176 = scalar_lea.vmem [#allocation5], 56
    %v1177 = vld [vmem:[%s1176] sm:$0xff]
    %1179 = vrot.lane.b32.xlu0 %v1175, 64
    %v1180 = vpop.permute.xlu0 %1179
    %v1182 = vmul.f32 %v1177, %v1180
    %v1183 = vadd.f32 %v1049, %v1182
    %s1184 = scalar_lea.vmem [#allocation2], 64
    %v1185 = vld [vmem:[%s1184] sm:$0xff]
    %v1186 = vadd.f32 %v1185, %v1153
    %v1187 = vtanh.pop %v1186
    %v1188 = vmul.f32 %v1187, 0.5
    %v1189 = vadd.f32 %v1188, 0.5
    %v1190 = vmul.f32 %v1189, %v1066
    %1192 = vrot.lane.b32.xlu0 %v1187, 32
    %v1193 = vpop.permute.xlu0 %1192
    %v1195 = vmul.f32 %v1189, %v1193
    %1197 = vrot.lane.b32.xlu0 %v1195, 32
    %v1198 = vpop.permute.xlu0 %1197
    %v1200 = vadd.f32 %v1190, %v1198
    %v1201 = vtanh.pop %v1200
    %1203 = vrot.lane.b32.xlu0 %v1201, 32
    %v1204 = vpop.permute.xlu0 %1203
    %v1206 = vmul.f32 %v1189, %v1204
    %1208 = vrot.lane.b32.xlu0 %v1206, 64
    %v1209 = vpop.permute.xlu0 %1208
    %1211 = vrot.lane.b32.xlu0 %v1175, 96
    %v1212 = vpop.permute.xlu0 %1211
    %v1214 = vsel %vm124, %v1209, %v1212
    %v1216 = vsel %vm142, %v1214, 0
    %1218 = vmatprep.subr.mxu0 %v127
    %1219 = vmatpush1.msra.mxu0 %v126
    %1220 = vmatprep.subr.mxu0 %v129
    %1221 = vmatpush1.msra.mxu0 %v128
    %1222 = vmatprep.subr.mxu0 %v131
    %1223 = vmatpush1.msra.mxu0 %v130
    %1224 = vmatprep.subr.mxu0 %v133
    %1225 = vmatpush1.msra.mxu0 %v132
    %1226 = vmatprep.subr.mxu0 %v135
    %1227 = vmatpush1.msra.mxu0 %v134
    %1228 = vmatprep.subr.mxu0 %v137
    %1229 = vmatpush1.msra.mxu0 %v136
    %1230 = vmatprep.subr.mxu0 %v139
    %1231 = vmatpush1.msra.mxu0 %v138
    %1232 = vmatprep.subr.mxu0 %v141
    %1233 = vmatpush1.msra.mxu0 %v140
    %1234 = vmatprep.subr.mxu0 0.0
    %1235 = vmatpush1.msra.mxu0 0.0
    %1236 = vmatprep.subr.mxu0 0.0
    %1237 = vmatpush1.msra.mxu0 0.0
    %1238 = vmatprep.subr.mxu0 0.0
    %1239 = vmatpush1.msra.mxu0 0.0
    %1240 = vmatprep.subr.mxu0 0.0
    %1241 = vmatpush1.msra.mxu0 0.0
    %1242 = vmatprep.subr.mxu0 0.0
    %1243 = vmatpush1.msra.mxu0 0.0
    %1244 = vmatprep.subr.mxu0 0.0
    %1245 = vmatpush1.msra.mxu0 0.0
    %1246 = vmatprep.subr.mxu0 0.0
    %1247 = vmatpush1.msra.mxu0 0.0
    %1248 = vmatprep.subr.mxu0 0.0
    %1249 = vmatpush1.msra.mxu0 0.0
    %1250 = vmatprep.subr.mxu0 0.0
    %1251 = vmatpush1.msra.mxu0 0.0
    %1252 = vmatprep.subr.mxu0 0.0
    %1253 = vmatpush1.msra.mxu0 0.0
    %1254 = vmatprep.subr.mxu0 0.0
    %1255 = vmatpush1.msra.mxu0 0.0
    %1256 = vmatprep.subr.mxu0 0.0
    %1257 = vmatpush1.msra.mxu0 0.0
    %1258 = vmatprep.subr.mxu0 0.0
    %1259 = vmatpush1.msra.mxu0 0.0
    %1260 = vmatprep.subr.mxu0 0.0
    %1261 = vmatpush1.msra.mxu0 0.0
    %1262 = vmatprep.subr.mxu0 0.0
    %1263 = vmatpush1.msra.mxu0 0.0
    %1264 = vmatprep.subr.mxu0 0.0
    %1265 = vmatpush1.msra.mxu0 0.0
    %1266 = vmatprep.subr.mxu0 0.0
    %1267 = vmatpush1.msra.mxu0 0.0
    %1268 = vmatprep.subr.mxu0 0.0
    %1269 = vmatpush1.msra.mxu0 0.0
    %1270 = vmatprep.subr.mxu0 0.0
    %1271 = vmatpush1.msra.mxu0 0.0
    %1272 = vmatprep.subr.mxu0 0.0
    %1273 = vmatpush1.msra.mxu0 0.0
    %1274 = vmatprep.subr.mxu0 0.0
    %1275 = vmatpush1.msra.mxu0 0.0
    %1276 = vmatprep.subr.mxu0 0.0
    %1277 = vmatpush1.msra.mxu0 0.0
    %1278 = vmatprep.subr.mxu0 0.0
    %1279 = vmatpush1.msra.mxu0 0.0
    %1280 = vmatprep.subr.mxu0 0.0
    %1281 = vmatpush1.msra.mxu0 0.0
    %1282 = vmatprep.mubr.f32.mxu0 0.0
    %1283 = vmatmul.mubr.f32.gmra.mrb[0].mxu0 %v1216
    %v1284 = vpop.f32.mrb[0].mxu0
    %v1285 = vadd.f32 0.0, %v1284
    %v1286 = vpop.f32.mrb[0].mxu0
    %1287 = vdwg.mxu0
    %v1288 = vadd.f32 %v1285, %v217
    %v1289 = vtanh.pop %v1288
    %v1290 = vmul.f32 %v1289, 0.5
    %v1291 = vadd.f32 %v1290, 0.5
    %v1292 = vmul.f32 %v1291, %v1169
    %1294 = vrot.lane.b32.xlu0 %v1289, 32
    %v1295 = vpop.permute.xlu0 %1294
    %v1297 = vmul.f32 %v1291, %v1295
    %1299 = vrot.lane.b32.xlu0 %v1297, 32
    %v1300 = vpop.permute.xlu0 %1299
    %v1302 = vadd.f32 %v1292, %v1300
    %v1303 = vtanh.pop %v1302
    %1305 = vrot.lane.b32.xlu0 %v1303, 32
    %v1306 = vpop.permute.xlu0 %1305
    %v1308 = vmul.f32 %v1291, %v1306
    %s1309 = scalar_lea.vmem [#allocation5], 64
    %v1310 = vld [vmem:[%s1309] sm:$0xff]
    %1312 = vrot.lane.b32.xlu0 %v1308, 64
    %v1313 = vpop.permute.xlu0 %1312
    %v1315 = vmul.f32 %v1310, %v1313
    %v1316 = vadd.f32 %v1183, %v1315
    %v1317 = vld [vmem:[#allocation8] sm:$0xff]
    %v1318 = vld [vmem:[#allocation8 + $0x8] sm:$0xff]
    %v1319 = vld [vmem:[#allocation8 + $0x10] sm:$0xff]
    %v1320 = vld [vmem:[#allocation8 + $0x18] sm:$0xff]
    %v1321 = vld [vmem:[%s5] sm:$0x1]
    %v1323 = vlaneseq
    %v1324 = vshrl.u32 %v1323, 7
    %v1325 = vsub.s32 0, %v1324
    %v1326 = vrot.slane %v1321, %v1325
    %v1329 = vsel %vm124, %v1316, 0
    %1331 = vmatprep.subr.mxu0 0.0
    %1332 = vmatpush1.msra.mxu0 %v1317
    %1333 = vmatprep.subr.mxu0 0.0
    %1334 = vmatpush1.msra.mxu0 %v1318
    %1335 = vmatprep.subr.mxu0 0.0
    %1336 = vmatpush1.msra.mxu0 %v1319
    %1337 = vmatprep.subr.mxu0 0.0
    %1338 = vmatpush1.msra.mxu0 %v1320
    %1339 = vmatprep.subr.mxu0 0.0
    %1340 = vmatpush1.msra.mxu0 0.0
    %1341 = vmatprep.subr.mxu0 0.0
    %1342 = vmatpush1.msra.mxu0 0.0
    %1343 = vmatprep.subr.mxu0 0.0
    %1344 = vmatpush1.msra.mxu0 0.0
    %1345 = vmatprep.subr.mxu0 0.0
    %1346 = vmatpush1.msra.mxu0 0.0
    %1347 = vmatprep.subr.mxu0 0.0
    %1348 = vmatpush1.msra.mxu0 0.0
    %1349 = vmatprep.subr.mxu0 0.0
    %1350 = vmatpush1.msra.mxu0 0.0
    %1351 = vmatprep.subr.mxu0 0.0
    %1352 = vmatpush1.msra.mxu0 0.0
    %1353 = vmatprep.subr.mxu0 0.0
    %1354 = vmatpush1.msra.mxu0 0.0
    %1355 = vmatprep.subr.mxu0 0.0
    %1356 = vmatpush1.msra.mxu0 0.0
    %1357 = vmatprep.subr.mxu0 0.0
    %1358 = vmatpush1.msra.mxu0 0.0
    %1359 = vmatprep.subr.mxu0 0.0
    %1360 = vmatpush1.msra.mxu0 0.0
    %1361 = vmatprep.subr.mxu0 0.0
    %1362 = vmatpush1.msra.mxu0 0.0
    %1363 = vmatprep.subr.mxu0 0.0
    %1364 = vmatpush1.msra.mxu0 0.0
    %1365 = vmatprep.subr.mxu0 0.0
    %1366 = vmatpush1.msra.mxu0 0.0
    %1367 = vmatprep.subr.mxu0 0.0
    %1368 = vmatpush1.msra.mxu0 0.0
    %1369 = vmatprep.subr.mxu0 0.0
    %1370 = vmatpush1.msra.mxu0 0.0
    %1371 = vmatprep.subr.mxu0 0.0
    %1372 = vmatpush1.msra.mxu0 0.0
    %1373 = vmatprep.subr.mxu0 0.0
    %1374 = vmatpush1.msra.mxu0 0.0
    %1375 = vmatprep.subr.mxu0 0.0
    %1376 = vmatpush1.msra.mxu0 0.0
    %1377 = vmatprep.subr.mxu0 0.0
    %1378 = vmatpush1.msra.mxu0 0.0
    %1379 = vmatprep.subr.mxu0 0.0
    %1380 = vmatpush1.msra.mxu0 0.0
    %1381 = vmatprep.subr.mxu0 0.0
    %1382 = vmatpush1.msra.mxu0 0.0
    %1383 = vmatprep.subr.mxu0 0.0
    %1384 = vmatpush1.msra.mxu0 0.0
    %1385 = vmatprep.subr.mxu0 0.0
    %1386 = vmatpush1.msra.mxu0 0.0
    %1387 = vmatprep.subr.mxu0 0.0
    %1388 = vmatpush1.msra.mxu0 0.0
    %1389 = vmatprep.subr.mxu0 0.0
    %1390 = vmatpush1.msra.mxu0 0.0
    %1391 = vmatprep.subr.mxu0 0.0
    %1392 = vmatpush1.msra.mxu0 0.0
    %1393 = vmatprep.subr.mxu0 0.0
    %1394 = vmatpush1.msra.mxu0 0.0
    %1395 = vmatprep.mubr.f32.mxu0 0.0
    %1396 = vmatmul.mubr.f32.gmra.mrb[0].mxu0 %v1329
    %v1397 = vpop.f32.mrb[0].mxu0
    %v1398 = vadd.f32 %v1326, %v1397
    %v1399 = vpop.f32.mrb[0].mxu0
    %1400 = vdwg.mxu0
    %vm1401 = vcmp.gt.f32.partialorder %v1398, 0.0
    %v1402 = vmul.f32 %v1398, 0.01
    %v1403 = vsel %vm1401, %v1398, %v1402
    %v1404 = vld [vmem:[#allocation10] sm:$0xff]
    %v1405 = vld [vmem:[#allocation10 + $0x8] sm:$0xff]
    %v1406 = vld [vmem:[#allocation10 + $0x10] sm:$0xff]
    %v1407 = vld [vmem:[#allocation10 + $0x18] sm:$0xff]
    %v1408 = vld [vmem:[%s7] sm:$0x1]
    %v1410 = vlaneseq
    %v1411 = vshrl.u32 %v1410, 7
    %v1412 = vsub.s32 0, %v1411
    %v1413 = vrot.slane %v1408, %v1412
    %v1416 = vsel %vm124, %v1403, 0
    %1418 = vmatprep.subr.mxu0 0.0
    %1419 = vmatpush1.msra.mxu0 %v1404
    %1420 = vmatprep.subr.mxu0 0.0
    %1421 = vmatpush1.msra.mxu0 %v1405
    %1422 = vmatprep.subr.mxu0 0.0
    %1423 = vmatpush1.msra.mxu0 %v1406
    %1424 = vmatprep.subr.mxu0 0.0
    %1425 = vmatpush1.msra.mxu0 %v1407
    %1426 = vmatprep.subr.mxu0 0.0
    %1427 = vmatpush1.msra.mxu0 0.0
    %1428 = vmatprep.subr.mxu0 0.0
    %1429 = vmatpush1.msra.mxu0 0.0
    %1430 = vmatprep.subr.mxu0 0.0
    %1431 = vmatpush1.msra.mxu0 0.0
    %1432 = vmatprep.subr.mxu0 0.0
    %1433 = vmatpush1.msra.mxu0 0.0
    %1434 = vmatprep.subr.mxu0 0.0
    %1435 = vmatpush1.msra.mxu0 0.0
    %1436 = vmatprep.subr.mxu0 0.0
    %1437 = vmatpush1.msra.mxu0 0.0
    %1438 = vmatprep.subr.mxu0 0.0
    %1439 = vmatpush1.msra.mxu0 0.0
    %1440 = vmatprep.subr.mxu0 0.0
    %1441 = vmatpush1.msra.mxu0 0.0
    %1442 = vmatprep.subr.mxu0 0.0
    %1443 = vmatpush1.msra.mxu0 0.0
    %1444 = vmatprep.subr.mxu0 0.0
    %1445 = vmatpush1.msra.mxu0 0.0
    %1446 = vmatprep.subr.mxu0 0.0
    %1447 = vmatpush1.msra.mxu0 0.0
    %1448 = vmatprep.subr.mxu0 0.0
    %1449 = vmatpush1.msra.mxu0 0.0
    %1450 = vmatprep.subr.mxu0 0.0
    %1451 = vmatpush1.msra.mxu0 0.0
    %1452 = vmatprep.subr.mxu0 0.0
    %1453 = vmatpush1.msra.mxu0 0.0
    %1454 = vmatprep.subr.mxu0 0.0
    %1455 = vmatpush1.msra.mxu0 0.0
    %1456 = vmatprep.subr.mxu0 0.0
    %1457 = vmatpush1.msra.mxu0 0.0
    %1458 = vmatprep.subr.mxu0 0.0
    %1459 = vmatpush1.msra.mxu0 0.0
    %1460 = vmatprep.subr.mxu0 0.0
    %1461 = vmatpush1.msra.mxu0 0.0
    %1462 = vmatprep.subr.mxu0 0.0
    %1463 = vmatpush1.msra.mxu0 0.0
    %1464 = vmatprep.subr.mxu0 0.0
    %1465 = vmatpush1.msra.mxu0 0.0
    %1466 = vmatprep.subr.mxu0 0.0
    %1467 = vmatpush1.msra.mxu0 0.0
    %1468 = vmatprep.subr.mxu0 0.0
    %1469 = vmatpush1.msra.mxu0 0.0
    %1470 = vmatprep.subr.mxu0 0.0
    %1471 = vmatpush1.msra.mxu0 0.0
    %1472 = vmatprep.subr.mxu0 0.0
    %1473 = vmatpush1.msra.mxu0 0.0
    %1474 = vmatprep.subr.mxu0 0.0
    %1475 = vmatpush1.msra.mxu0 0.0
    %1476 = vmatprep.subr.mxu0 0.0
    %1477 = vmatpush1.msra.mxu0 0.0
    %1478 = vmatprep.subr.mxu0 0.0
    %1479 = vmatpush1.msra.mxu0 0.0
    %1480 = vmatprep.subr.mxu0 0.0
    %1481 = vmatpush1.msra.mxu0 0.0
    %1482 = vmatprep.mubr.f32.mxu0 0.0
    %1483 = vmatmul.mubr.f32.gmra.mrb[0].mxu0 %v1416
    %v1484 = vpop.f32.mrb[0].mxu0
    %v1485 = vadd.f32 %v1413, %v1484
    %v1486 = vpop.f32.mrb[0].mxu0
    %1487 = vdwg.mxu0
    %1488 = vst [vmem:[#allocation11] sm:$0xff] %v1485
    // Predicated region
    $region54: #{tpu_custom_call.1} parent=1 // pred_check
      _
    $region55: #{tpu_custom_call.1} parent=1 // pred_check_branch
      %1490 = sbr.rel (0) target = $region57
    $region56: #{tpu_custom_call.1} parent=1 // pred_region
      %s1492 = ssub.s32 128, 128
      %1493 = vsyncadd [#allocation4], %s1492
      %s1495 = sshll.u32 [#allocation11], 4
      %s1496 = int_to_ptr.vmem [resolvable:$true] %s1495
      %1498 = dma.vmem_to_hbm [thread:$0]  %s1496, 128, %s8, [#allocation4]
    $region57: #{tpu_custom_call.1} parent=1 // pred_fallthru
      _
    // Predicated region
    $region58: #{tpu_custom_call.1} parent=1 // pred_check
      _
    $region59: #{tpu_custom_call.1} parent=1 // pred_check_branch
      %1500 = sbr.rel (0) target = $region61
    $region60: #{tpu_custom_call.1} parent=1 // pred_region
      %1501 = dma.done [#allocation4], 128
    $region61: #{tpu_custom_call.1} parent=1 // pred_fallthru
      _
    %1502 = vsyncpa [#allocation3], 1
    %1503 = vsyncpa [#allocation6], 1
    %1504 = vsyncpa [#allocation9], 1
    %1505 = vsyncpa [#allocation4], 1

</llo_original>
